<compile_context>
chip_gen: v6e
topology: v6e:2x2x1
jax: 0.10.0
libtpu: 0.0.40
codegen_flags: <defaults>
</compile_context>

<pallas_src>
import functools

import jax
import jax.numpy as jnp
from jax.experimental import pallas as pl
from jax.experimental.pallas import tpu as pltpu


def _round_up(x, m):
    return (x + m - 1) // m * m


def _pad_affine(v, cpad):
    v = v.reshape(1, -1).astype(jnp.float32)
    return jnp.pad(v, ((0, 0), (0, cpad - v.shape[1])))


def _pick_conv_row_tile(ho, wo, max_rows=1024):
    """Largest th dividing ho with th*wo <= max_rows and (th*wo) % 8 == 0."""
    for th in range(ho, 0, -1):
        if ho % th:
            continue
        rows = th * wo
        if rows <= max_rows and rows % 8 == 0:
            return th
    # TODO(synk): for widths with no 8-aligned row tile this falls back to a
    # whole-sample block (legal; reshape may relayout) -- fine at these scales.
    return ho


def _pick_gn_row_tile(hw, max_rows=2048):
    for t in range(min(hw, max_rows), 0, -1):
        if hw % t == 0 and (t % 8 == 0 or t == hw):
            return t
    return hw


# ----------------------------------------------------------------------------
# Implicit-GEMM convolution (shift-and-accumulate over taps, no im2col)
# ----------------------------------------------------------------------------
def _conv_kernel(x_ref, w_ref, o_ref, acc_ref, *, tap_offsets, wo, th):
    base = pl.program_id(1) * th
    for t, (ro, co) in enumerate(tap_offsets):
        xs = x_ref[0, pl.ds(base + ro, th), pl.ds(co, wo), :]     # (th, wo, Cin)
        xs = xs.reshape(th * wo, xs.shape[-1])                    # lane dim untouched
        contrib = jnp.dot(xs, w_ref[t], preferred_element_type=jnp.float32)
        if t == 0:
            acc_ref[...] = contrib
        else:
            acc_ref[...] += contrib
    o_ref[0] = acc_ref[...].astype(o_ref.dtype)


def pallas_conv(xc, w_oihw, *, stride, pad, out_dtype=jnp.bfloat16):
    """Implicit-GEMM conv.  xc: (N, H, W, Cin_pad) bf16 with zero-padded extra
    channels; w_oihw: (Cout, Cin, kh, kw).  Returns ((N, Ho*Wo, Cout_pad), Ho, Wo)."""
    N, H, W, cin_pad = xc.shape
    cout, cin, kh, kw = w_oihw.shape
    assert cin <= cin_pad
    s = stride
    Ho = (H + 2 * pad - kh) // s + 1
    Wo = (W + 2 * pad - kw) // s + 1
    Hq = Ho + (kh - 1) // s
    Wq = Wo + (kw - 1) // s
    cout_pad = _round_up(cout, 128)

    # Weights -> (taps, Cin_pad, Cout_pad) bf16, tap order (kh, kw).
    wm = jnp.transpose(w_oihw, (2, 3, 1, 0)).reshape(kh * kw, cin, cout)
    wm = jnp.pad(wm.astype(jnp.bfloat16),
                 ((0, 0), (0, cin_pad - cin), (0, cout_pad - cout)))

    # Stride-phase decomposition of the padded input: phase (ph, pw) holds
    # x_padded[:, ph::s, pw::s, :], stacked along H.  Each tap then reads a
    # contiguous (th, Wo) window of one phase -> no im2col expansion.
    pad_b = s * Hq - H - pad
    pad_r = s * Wq - W - pad
    assert pad_b >= 0 and pad_r >= 0
    xe = jnp.pad(xc, ((0, 0), (pad, pad_b), (pad, pad_r), (0, 0)))
    phase_ids = sorted({(dh % s, dw % s) for dh in range(kh) for dw in range(kw)})
    phase_pos = {p: i for i, p in enumerate(phase_ids)}
    if s == 1:
        x_ph = xe
    else:
        x_ph = jnp.concatenate([xe[:, ph::s, pw::s, :] for (ph, pw) in phase_ids],
                               axis=1)
    n_phase = len(phase_ids)
    tap_offsets = tuple(
        (phase_pos[(dh % s, dw % s)] * Hq + dh // s, dw // s)
        for dh in range(kh) for dw in range(kw))

    th = _pick_conv_row_tile(Ho, Wo)
    tn = 256 if cout_pad % 256 == 0 else 128
    n_h = Ho // th
    n_co = cout_pad // tn

    kernel = functools.partial(_conv_kernel, tap_offsets=tap_offsets, wo=Wo, th=th)
    out = pl.pallas_call(
        kernel,
        out_shape=jax.ShapeDtypeStruct((N, Ho * Wo, cout_pad), out_dtype),
        grid=(N, n_h, n_co),
        in_specs=[
            # full per-sample slab; block index constant over (i, j) so the DMA
            # is issued once per sample
            pl.BlockSpec((1, n_phase * Hq, Wq, cin_pad),
                         lambda n, i, j: (n, 0, 0, 0)),
            pl.BlockSpec((kh * kw, cin_pad, tn), lambda n, i, j: (0, 0, j)),
        ],
        out_specs=pl.BlockSpec((1, th * Wo, tn), lambda n, i, j: (n, i, j)),
        scratch_shapes=[pltpu.VMEM((th * Wo, tn), jnp.float32)],
        compiler_params=pltpu.CompilerParams(
            dimension_semantics=("parallel", "parallel", "parallel"),
            vmem_limit_bytes=32 * 1024 * 1024),
    )(x_ph, wm)
    return out, Ho, Wo


# ----------------------------------------------------------------------------
# GroupNorm: tiled stats kernel -> per-channel (scale, shift); elementwise apply
# ----------------------------------------------------------------------------
def _gn_stats_kernel(y_ref, g_ref, b_ref, ab_ref, s1_ref, s2_ref, *,
                     num_groups, c_real, eps, count):
    i = pl.program_id(1)

    @pl.when(i == 0)
    def _():
        s1_ref[...] = jnp.zeros_like(s1_ref)
        s2_ref[...] = jnp.zeros_like(s2_ref)

    y = y_ref[0].astype(jnp.float32)                      # (thw, Cpad)
    s1_ref[...] += jnp.sum(y, axis=0, keepdims=True)
    s2_ref[...] += jnp.sum(y * y, axis=0, keepdims=True)

    @pl.when(i == pl.num_programs(1) - 1)
    def _():
        cpad = s1_ref.shape[-1]
        cpg = c_real // num_groups
        ch = jax.lax.broadcasted_iota(jnp.int32, (1, cpad), 1)
        s1 = s1_ref[...]
        s2 = s2_ref[...]
        scale = jnp.zeros((1, cpad), jnp.float32)
        shift = jnp.zeros((1, cpad), jnp.float32)
        for g in range(num_groups):                       # static, num_groups == 2
            m = ((ch >= g * cpg) & (ch < (g + 1) * cpg)).astype(jnp.float32)
            mu = jnp.sum(s1 * m) / count
            # TODO(synk): one-pass E[x^2]-mean^2 can lose precision for
            # large-mean activations; switch to a mean-shifted pass if needed.
            var = jnp.maximum(jnp.sum(s2 * m) / count - mu * mu, 0.0)
            r = jax.lax.rsqrt(var + eps)
            scale = scale + m * r
            shift = shift + m * (-mu * r)
        a = scale * g_ref[...]
        b = shift * g_ref[...] + b_ref[...]
        ab_ref[0] = jnp.concatenate([a, b], axis=0)       # (2, Cpad)


def pallas_gn_stats(y, gamma, beta, num_groups, c_real, *, eps=1e-5):
    """Returns (N, 2, Cpad) f32: row 0 = per-channel scale, row 1 = shift, such
    that GN(y) == y*scale + shift.  Padded channels get scale=shift=0."""
    N, HW, cpad = y.shape
    thw = _pick_gn_row_tile(HW)
    kernel = functools.partial(
        _gn_stats_kernel, num_groups=num_groups, c_real=c_real, eps=eps,
        count=float(HW * (c_real // num_groups)))
    return pl.pallas_call(
        kernel,
        out_shape=jax.ShapeDtypeStruct((N, 2, cpad), jnp.float32),
        grid=(N, HW // thw),
        in_specs=[pl.BlockSpec((1, thw, cpad), lambda n, i: (n, i, 0)),
                  pl.BlockSpec((1, cpad), lambda n, i: (0, 0)),
                  pl.BlockSpec((1, cpad), lambda n, i: (0, 0))],
        out_specs=pl.BlockSpec((1, 2, cpad), lambda n, i: (n, 0, 0)),
        scratch_shapes=[pltpu.VMEM((1, cpad), jnp.float32),
                        pltpu.VMEM((1, cpad), jnp.float32)],
        compiler_params=pltpu.CompilerParams(
            dimension_semantics=("parallel", "arbitrary")),
    )(y, _pad_affine(gamma, cpad), _pad_affine(beta, cpad))


def _gn_apply_relu_kernel(y_ref, ab_ref, o_ref):
    a = ab_ref[0, 0:1, :]
    b = ab_ref[0, 1:2, :]
    o_ref[0] = jnp.maximum(y_ref[0].astype(jnp.float32) * a + b, 0.0).astype(o_ref.dtype)


def pallas_gn_apply_relu(y, ab, *, out_dtype=jnp.bfloat16):
    N, HW, cpad = y.shape
    thw = _pick_gn_row_tile(HW)
    return pl.pallas_call(
        _gn_apply_relu_kernel,
        out_shape=jax.ShapeDtypeStruct((N, HW, cpad), out_dtype),
        grid=(N, HW // thw),
        in_specs=[pl.BlockSpec((1, thw, cpad), lambda n, i: (n, i, 0)),
                  pl.BlockSpec((1, 2, cpad), lambda n, i: (n, 0, 0))],
        out_specs=pl.BlockSpec((1, thw, cpad), lambda n, i: (n, i, 0)),
        compiler_params=pltpu.CompilerParams(
            dimension_semantics=("parallel", "parallel")),
    )(y, ab)


def _gn_residual_relu_kernel(y_ref, ab_ref, r_ref, abr_ref, o_ref):
    a = ab_ref[0, 0:1, :]
    b = ab_ref[0, 1:2, :]
    ar = abr_ref[0, 0:1, :]
    br = abr_ref[0, 1:2, :]
    y = y_ref[0].astype(jnp.float32) * a + b
    r = r_ref[0].astype(jnp.float32) * ar + br
    o_ref[0] = jnp.maximum(y + r, 0.0).astype(o_ref.dtype)


def pallas_gn_residual_relu(y, ab, res, ab_res, *, out_dtype=jnp.float32):
    """relu(y*a+b + res*ar+br): GN2 + (GN'd or identity) shortcut + add + ReLU."""
    N, HW, cpad = y.shape
    thw = _pick_gn_row_tile(HW)
    return pl.pallas_call(
        _gn_residual_relu_kernel,
        out_shape=jax.ShapeDtypeStruct((N, HW, cpad), out_dtype),
        grid=(N, HW // thw),
        in_specs=[pl.BlockSpec((1, thw, cpad), lambda n, i: (n, i, 0)),
                  pl.BlockSpec((1, 2, cpad), lambda n, i: (n, 0, 0)),
                  pl.BlockSpec((1, thw, cpad), lambda n, i: (n, i, 0)),
                  pl.BlockSpec((1, 2, cpad), lambda n, i: (n, 0, 0))],
        out_specs=pl.BlockSpec((1, thw, cpad), lambda n, i: (n, i, 0)),
        compiler_params=pltpu.CompilerParams(
            dimension_semantics=("parallel", "parallel")),
    )(y, ab, res, ab_res)


# ----------------------------------------------------------------------------
# BasicBlock forward (Pallas)
# ----------------------------------------------------------------------------
def basic_block_forward(x_nchw, params, stride):
    x = jnp.transpose(x_nchw, (0, 2, 3, 1))                 # NCHW -> NHWC
    N, H, W, cin = x.shape
    planes = params["conv1"].shape[0]
    cpad = _round_up(planes, 128)
    cin_pad = _round_up(cin, 128)
    xc = jnp.pad(x.astype(jnp.bfloat16),
                 ((0, 0), (0, 0), (0, 0), (0, cin_pad - cin)))   # bf16, lane-dense

    # conv1 (3x3, stride) -> GN1 -> ReLU, all bf16 intermediates
    c1, Ho, Wo = pallas_conv(xc, params["conv1"], stride=stride, pad=1)
    ab1 = pallas_gn_stats(c1, params["gn1_gamma"], params["gn1_beta"], 2, planes)
    o1 = pallas_gn_apply_relu(c1, ab1, out_dtype=jnp.bfloat16)

    # conv2 (3x3, stride 1) on the still-128-padded activation (no slice/repad)
    # TODO(synk): fold the spatial re-pad between GN1 and conv2 into the conv
    # kernel (boundary masking) to save one HBM copy of o1.
    o1 = o1.reshape(N, Ho, Wo, cpad)
    c2, Ho2, Wo2 = pallas_conv(o1, params["conv2"], stride=1, pad=1)
    ab2 = pallas_gn_stats(c2, params["gn2_gamma"], params["gn2_beta"], 2, planes)

    if stride != 1 or cin != planes:
        # shortcut: 1x1 strided conv (same implicit-GEMM kernel, k=1) + GN
        cd, _, _ = pallas_conv(xc, params["convd"], stride=stride, pad=0)
        abd = pallas_gn_stats(cd, params["gnd_gamma"], params["gnd_beta"], 2, planes)
        out = pallas_gn_residual_relu(c2, ab2, cd, abd)
    else:
        # identity shortcut, bf16, already channel-padded (cin == planes)
        res = xc.reshape(N, H * W, cpad)
        ab_id = jnp.concatenate(
            [jnp.ones((1, 1, cpad), jnp.float32), jnp.zeros((1, 1, cpad), jnp.float32)],
            axis=1)
        ab_id = jnp.broadcast_to(ab_id, (N, 2, cpad))
        out = pallas_gn_residual_relu(c2, ab2, res, ab_id)

    out = out[..., :planes].reshape(N, Ho2, Wo2, planes)
    return jnp.transpose(out, (0, 3, 1, 2))                  # -> NCHW


# ----------------------------------------------------------------------------
# Pure-JAX reference (numerical sanity check)
# ----------------------------------------------------------------------------
def _ref_gn(x, gamma, beta, groups, eps=1e-5):
    n, c, h, w = x.shape
    xg = x.reshape(n, groups, c // groups, h, w)
    mean = xg.mean(axis=(2, 3, 4), keepdims=True)
    var = ((xg - mean) ** 2).mean(axis=(2, 3, 4), keepdims=True)
    xn = ((xg - mean) / jnp.sqrt(var + eps)).reshape(n, c, h, w)
    return xn * gamma.reshape(1, c, 1, 1) + beta.reshape(1, c, 1, 1)


def _ref_conv(x, w, stride, pad):
    return jax.lax.conv_general_dilated(
        x, w, window_strides=(stride, stride), padding=((pad, pad), (pad, pad)),
        dimension_numbers=("NCHW", "OIHW", "NCHW"))


def reference_forward(x, params, stride, in_planes, planes):
    out = jax.nn.relu(_ref_gn(_ref_conv(x, params["conv1"], stride, 1),
                              params["gn1_gamma"], params["gn1_beta"], 2))
    out = _ref_gn(_ref_conv(out, params["conv2"], 1, 1),
                  params["gn2_gamma"], params["gn2_beta"], 2)
    if stride != 1 or in_planes != planes:
        sc = _ref_gn(_ref_conv(x, params["convd"], stride, 0),
                     params["gnd_gamma"], params["gnd_beta"], 2)
    else:
        sc = x
    return jax.nn.relu(out + sc)


# ----------------------------------------------------------------------------
if __name__ == "__main__":
    key = jax.random.PRNGKey(0)
    ks = jax.random.split(key, 16)

    # ---- Config 1: downsample path (stride=2, in_planes != planes) ----
    in_planes, planes, stride = 4, 8, 2
    N, H, W = 2, 16, 16
    params = {
        "conv1": 0.2 * jax.random.normal(ks[0], (planes, in_planes, 3, 3), jnp.float32),
        "conv2": 0.2 * jax.random.normal(ks[1], (planes, planes, 3, 3), jnp.float32),
        "convd": 0.2 * jax.random.normal(ks[2], (planes, in_planes, 1, 1), jnp.float32),
        "gn1_gamma": 1.0 + 0.1 * jax.random.normal(ks[3], (planes,), jnp.float32),
        "gn1_beta": 0.1 * jax.random.normal(ks[4], (planes,), jnp.float32),
        "gn2_gamma": 1.0 + 0.1 * jax.random.normal(ks[5], (planes,), jnp.float32),
        "gn2_beta": 0.1 * jax.random.normal(ks[6], (planes,), jnp.float32),
        "gnd_gamma": jnp.ones((planes,), jnp.float32),
        "gnd_beta": jnp.zeros((planes,), jnp.float32),
    }
    x = jax.random.normal(ks[7], (N, in_planes, H, W), jnp.float32)

    out = jax.block_until_ready(basic_block_forward(x, params, stride))
    assert out.shape == (N, planes, H // stride, W // stride), out.shape
    assert bool(jnp.all(jnp.isfinite(out)))
    ref = jax.block_until_ready(reference_forward(x, params, stride, in_planes, planes))
    err1 = float(jnp.max(jnp.abs(out - ref)))
    assert err1 < 8e-2, f"downsample path max abs err {err1}"  # bf16 MXU/intermediates

    # ---- Config 2: identity shortcut (stride=1, in_planes == planes) ----
    in_planes2, planes2, stride2 = 8, 8, 1
    N2, H2, W2 = 2, 8, 8
    params2 = {
        "conv1": 0.2 * jax.random.normal(ks[8], (planes2, in_planes2, 3, 3), jnp.float32),
        "conv2": 0.2 * jax.random.normal(ks[9], (planes2, planes2, 3, 3), jnp.float32),
        "gn1_gamma": 1.0 + 0.1 * jax.random.normal(ks[10], (planes2,), jnp.float32),
        "gn1_beta": 0.1 * jax.random.normal(ks[11], (planes2,), jnp.float32),
        "gn2_gamma": 1.0 + 0.1 * jax.random.normal(ks[12], (planes2,), jnp.float32),
        "gn2_beta": 0.1 * jax.random.normal(ks[13], (planes2,), jnp.float32),
    }
    x2 = jax.random.normal(ks[14], (N2, in_planes2, H2, W2), jnp.float32)

    out2 = jax.block_until_ready(basic_block_forward(x2, params2, stride2))
    assert out2.shape == (N2, planes2, H2, W2), out2.shape
    assert bool(jnp.all(jnp.isfinite(out2)))
    ref2 = jax.block_until_ready(
        reference_forward(x2, params2, stride2, in_planes2, planes2))
    err2 = float(jnp.max(jnp.abs(out2 - ref2)))
    assert err2 < 8e-2, f"identity path max abs err {err2}"

    print("KERNEL_OK")
</pallas_src>

<mosaic_0001>
module attributes {stable_mosaic.version = 11 : i64} {
  func.func @_conv_kernel(%arg0: i32, %arg1: i32, %arg2: i32, %arg3: memref<1x36x9x128xbf16, #tpu.memory_space<vmem>>, %arg4: memref<9x128x128xbf16, #tpu.memory_space<vmem>>, %arg5: memref<1x64x128xbf16, #tpu.memory_space<vmem>>, %arg6: memref<64x128xf32, #tpu.memory_space<vmem>>) attributes {dimension_semantics = [#tpu.dimension_semantics<parallel>, #tpu.dimension_semantics<parallel>, #tpu.dimension_semantics<parallel>], iteration_bounds = array<i64: 2, 1, 1>, scalar_prefetch = 0 : i64, scratch_operands = 1 : i64, tpu.core_type = #tpu.core_type<tc>, window_params = [{transform_indices = @transform_0, window_bounds = array<i64: 1, 36, 9, 128>}, {transform_indices = @transform_1, window_bounds = array<i64: 9, 128, 128>}, {transform_indices = @transform_2, window_bounds = array<i64: 1, 64, 128>}]} {
    %c8_i32 = arith.constant 8 : i32
    %0 = arith.muli %arg1, %c8_i32 : i32
    %c0_i32 = arith.constant 0 : i32
    %1 = arith.addi %0, %c0_i32 : i32
    %c0 = arith.constant 0 : index
    %2 = arith.index_cast %1 : i32 to index
    %c0_0 = arith.constant 0 : index
    %c0_1 = arith.constant 0 : index
    %3 = vector.load %arg3[%c0, %2, %c0_0, %c0_1] : memref<1x36x9x128xbf16, #tpu.memory_space<vmem>>, vector<1x8x8x128xbf16>
    %4 = vector.shape_cast %3 : vector<1x8x8x128xbf16> to vector<8x8x128xbf16>
    %5 = vector.shape_cast %4 : vector<8x8x128xbf16> to vector<64x128xbf16>
    %c0_2 = arith.constant 0 : index
    %c0_3 = arith.constant 0 : index
    %c0_4 = arith.constant 0 : index
    %6 = vector.load %arg4[%c0_2, %c0_3, %c0_4] : memref<9x128x128xbf16, #tpu.memory_space<vmem>>, vector<1x128x128xbf16>
    %7 = vector.shape_cast %6 : vector<1x128x128xbf16> to vector<128x128xbf16>
    %cst = arith.constant dense<0.000000e+00> : vector<64x128xf32>
    %8 = tpu.matmul %5, %7, %cst {dimension_numbers = #tpu.dot_dimension_numbers<[1], [0], [0], [1], [0, 0, 1, 1], [], []>} : vector<64x128xbf16>, vector<128x128xbf16>, vector<64x128xf32> -> vector<64x128xf32>
    %c0_5 = arith.constant 0 : index
    %c0_6 = arith.constant 0 : index
    %9 = vector.load %arg6[%c0_5, %c0_6] : memref<64x128xf32, #tpu.memory_space<vmem>>, vector<64x128xf32>
    tpu.vector_store %arg6[%c0_5, %c0_6], %8 {strides = array<i32>} : memref<64x128xf32, #tpu.memory_space<vmem>>, vector<64x128xf32>,
    %c9_i32 = arith.constant 9 : i32
    %10 = arith.addi %0, %c9_i32 : i32
    %c0_7 = arith.constant 0 : index
    %11 = arith.index_cast %10 : i32 to index
    %c0_8 = arith.constant 0 : index
    %c0_9 = arith.constant 0 : index
    %12 = vector.load %arg3[%c0_7, %11, %c0_8, %c0_9] : memref<1x36x9x128xbf16, #tpu.memory_space<vmem>>, vector<1x8x8x128xbf16>
    %13 = vector.shape_cast %12 : vector<1x8x8x128xbf16> to vector<8x8x128xbf16>
    %14 = vector.shape_cast %13 : vector<8x8x128xbf16> to vector<64x128xbf16>
    %c1 = arith.constant 1 : index
    %c0_10 = arith.constant 0 : index
    %c0_11 = arith.constant 0 : index
    %15 = vector.load %arg4[%c1, %c0_10, %c0_11] : memref<9x128x128xbf16, #tpu.memory_space<vmem>>, vector<1x128x128xbf16>
    %16 = vector.shape_cast %15 : vector<1x128x128xbf16> to vector<128x128xbf16>
    %cst_12 = arith.constant dense<0.000000e+00> : vector<64x128xf32>
    %17 = tpu.matmul %14, %16, %cst_12 {dimension_numbers = #tpu.dot_dimension_numbers<[1], [0], [0], [1], [0, 0, 1, 1], [], []>} : vector<64x128xbf16>, vector<128x128xbf16>, vector<64x128xf32> -> vector<64x128xf32>
    %c0_13 = arith.constant 0 : index
    %c0_14 = arith.constant 0 : index
    %18 = vector.load %arg6[%c0_13, %c0_14] : memref<64x128xf32, #tpu.memory_space<vmem>>, vector<64x128xf32>
    %19 = arith.addf %18, %17 : vector<64x128xf32>
    %c0_15 = arith.constant 0 : index
    %c0_16 = arith.constant 0 : index
    %20 = vector.load %arg6[%c0_15, %c0_16] : memref<64x128xf32, #tpu.memory_space<vmem>>, vector<64x128xf32>
    tpu.vector_store %arg6[%c0_15, %c0_16], %19 {strides = array<i32>} : memref<64x128xf32, #tpu.memory_space<vmem>>, vector<64x128xf32>,
    %c0_i32_17 = arith.constant 0 : i32
    %21 = arith.addi %0, %c0_i32_17 : i32
    %c0_18 = arith.constant 0 : index
    %22 = arith.index_cast %21 : i32 to index
    %c1_19 = arith.constant 1 : index
    %c0_20 = arith.constant 0 : index
    %23 = vector.load %arg3[%c0_18, %22, %c1_19, %c0_20] : memref<1x36x9x128xbf16, #tpu.memory_space<vmem>>, vector<1x8x8x128xbf16>
    %24 = vector.shape_cast %23 : vector<1x8x8x128xbf16> to vector<8x8x128xbf16>
    %25 = vector.shape_cast %24 : vector<8x8x128xbf16> to vector<64x128xbf16>
    %c2 = arith.constant 2 : index
    %c0_21 = arith.constant 0 : index
    %c0_22 = arith.constant 0 : index
    %26 = vector.load %arg4[%c2, %c0_21, %c0_22] : memref<9x128x128xbf16, #tpu.memory_space<vmem>>, vector<1x128x128xbf16>
    %27 = vector.shape_cast %26 : vector<1x128x128xbf16> to vector<128x128xbf16>
    %cst_23 = arith.constant dense<0.000000e+00> : vector<64x128xf32>
    %28 = tpu.matmul %25, %27, %cst_23 {dimension_numbers = #tpu.dot_dimension_numbers<[1], [0], [0], [1], [0, 0, 1, 1], [], []>} : vector<64x128xbf16>, vector<128x128xbf16>, vector<64x128xf32> -> vector<64x128xf32>
    %c0_24 = arith.constant 0 : index
    %c0_25 = arith.constant 0 : index
    %29 = vector.load %arg6[%c0_24, %c0_25] : memref<64x128xf32, #tpu.memory_space<vmem>>, vector<64x128xf32>
    %30 = arith.addf %29, %28 : vector<64x128xf32>
    %c0_26 = arith.constant 0 : index
    %c0_27 = arith.constant 0 : index
    %31 = vector.load %arg6[%c0_26, %c0_27] : memref<64x128xf32, #tpu.memory_space<vmem>>, vector<64x128xf32>
    tpu.vector_store %arg6[%c0_26, %c0_27], %30 {strides = array<i32>} : memref<64x128xf32, #tpu.memory_space<vmem>>, vector<64x128xf32>,
    %c18_i32 = arith.constant 18 : i32
    %32 = arith.addi %0, %c18_i32 : i32
    %c0_28 = arith.constant 0 : index
    %33 = arith.index_cast %32 : i32 to index
    %c0_29 = arith.constant 0 : index
    %c0_30 = arith.constant 0 : index
    %34 = vector.load %arg3[%c0_28, %33, %c0_29, %c0_30] : memref<1x36x9x128xbf16, #tpu.memory_space<vmem>>, vector<1x8x8x128xbf16>
    %35 = vector.shape_cast %34 : vector<1x8x8x128xbf16> to vector<8x8x128xbf16>
    %36 = vector.shape_cast %35 : vector<8x8x128xbf16> to vector<64x128xbf16>
    %c3 = arith.constant 3 : index
    %c0_31 = arith.constant 0 : index
    %c0_32 = arith.constant 0 : index
    %37 = vector.load %arg4[%c3, %c0_31, %c0_32] : memref<9x128x128xbf16, #tpu.memory_space<vmem>>, vector<1x128x128xbf16>
    %38 = vector.shape_cast %37 : vector<1x128x128xbf16> to vector<128x128xbf16>
    %cst_33 = arith.constant dense<0.000000e+00> : vector<64x128xf32>
    %39 = tpu.matmul %36, %38, %cst_33 {dimension_numbers = #tpu.dot_dimension_numbers<[1], [0], [0], [1], [0, 0, 1, 1], [], []>} : vector<64x128xbf16>, vector<128x128xbf16>, vector<64x128xf32> -> vector<64x128xf32>
    %c0_34 = arith.constant 0 : index
    %c0_35 = arith.constant 0 : index
    %40 = vector.load %arg6[%c0_34, %c0_35] : memref<64x128xf32, #tpu.memory_space<vmem>>, vector<64x128xf32>
    %41 = arith.addf %40, %39 : vector<64x128xf32>
    %c0_36 = arith.constant 0 : index
    %c0_37 = arith.constant 0 : index
    %42 = vector.load %arg6[%c0_36, %c0_37] : memref<64x128xf32, #tpu.memory_space<vmem>>, vector<64x128xf32>
    tpu.vector_store %arg6[%c0_36, %c0_37], %41 {strides = array<i32>} : memref<64x128xf32, #tpu.memory_space<vmem>>, vector<64x128xf32>,
    %c27_i32 = arith.constant 27 : i32
    %43 = arith.addi %0, %c27_i32 : i32
    %c0_38 = arith.constant 0 : index
    %44 = arith.index_cast %43 : i32 to index
    %c0_39 = arith.constant 0 : index
    %c0_40 = arith.constant 0 : index
    %45 = vector.load %arg3[%c0_38, %44, %c0_39, %c0_40] : memref<1x36x9x128xbf16, #tpu.memory_space<vmem>>, vector<1x8x8x128xbf16>
    %46 = vector.shape_cast %45 : vector<1x8x8x128xbf16> to vector<8x8x128xbf16>
    %47 = vector.shape_cast %46 : vector<8x8x128xbf16> to vector<64x128xbf16>
    %c4 = arith.constant 4 : index
    %c0_41 = arith.constant 0 : index
    %c0_42 = arith.constant 0 : index
    %48 = vector.load %arg4[%c4, %c0_41, %c0_42] : memref<9x128x128xbf16, #tpu.memory_space<vmem>>, vector<1x128x128xbf16>
    %49 = vector.shape_cast %48 : vector<1x128x128xbf16> to vector<128x128xbf16>
    %cst_43 = arith.constant dense<0.000000e+00> : vector<64x128xf32>
    %50 = tpu.matmul %47, %49, %cst_43 {dimension_numbers = #tpu.dot_dimension_numbers<[1], [0], [0], [1], [0, 0, 1, 1], [], []>} : vector<64x128xbf16>, vector<128x128xbf16>, vector<64x128xf32> -> vector<64x128xf32>
    %c0_44 = arith.constant 0 : index
    %c0_45 = arith.constant 0 : index
    %51 = vector.load %arg6[%c0_44, %c0_45] : memref<64x128xf32, #tpu.memory_space<vmem>>, vector<64x128xf32>
    %52 = arith.addf %51, %50 : vector<64x128xf32>
    %c0_46 = arith.constant 0 : index
    %c0_47 = arith.constant 0 : index
    %53 = vector.load %arg6[%c0_46, %c0_47] : memref<64x128xf32, #tpu.memory_space<vmem>>, vector<64x128xf32>
    tpu.vector_store %arg6[%c0_46, %c0_47], %52 {strides = array<i32>} : memref<64x128xf32, #tpu.memory_space<vmem>>, vector<64x128xf32>,
    %c18_i32_48 = arith.constant 18 : i32
    %54 = arith.addi %0, %c18_i32_48 : i32
    %c0_49 = arith.constant 0 : index
    %55 = arith.index_cast %54 : i32 to index
    %c1_50 = arith.constant 1 : index
    %c0_51 = arith.constant 0 : index
    %56 = vector.load %arg3[%c0_49, %55, %c1_50, %c0_51] : memref<1x36x9x128xbf16, #tpu.memory_space<vmem>>, vector<1x8x8x128xbf16>
    %57 = vector.shape_cast %56 : vector<1x8x8x128xbf16> to vector<8x8x128xbf16>
    %58 = vector.shape_cast %57 : vector<8x8x128xbf16> to vector<64x128xbf16>
    %c5 = arith.constant 5 : index
    %c0_52 = arith.constant 0 : index
    %c0_53 = arith.constant 0 : index
    %59 = vector.load %arg4[%c5, %c0_52, %c0_53] : memref<9x128x128xbf16, #tpu.memory_space<vmem>>, vector<1x128x128xbf16>
    %60 = vector.shape_cast %59 : vector<1x128x128xbf16> to vector<128x128xbf16>
    %cst_54 = arith.constant dense<0.000000e+00> : vector<64x128xf32>
    %61 = tpu.matmul %58, %60, %cst_54 {dimension_numbers = #tpu.dot_dimension_numbers<[1], [0], [0], [1], [0, 0, 1, 1], [], []>} : vector<64x128xbf16>, vector<128x128xbf16>, vector<64x128xf32> -> vector<64x128xf32>
    %c0_55 = arith.constant 0 : index
    %c0_56 = arith.constant 0 : index
    %62 = vector.load %arg6[%c0_55, %c0_56] : memref<64x128xf32, #tpu.memory_space<vmem>>, vector<64x128xf32>
    %63 = arith.addf %62, %61 : vector<64x128xf32>
    %c0_57 = arith.constant 0 : index
    %c0_58 = arith.constant 0 : index
    %64 = vector.load %arg6[%c0_57, %c0_58] : memref<64x128xf32, #tpu.memory_space<vmem>>, vector<64x128xf32>
    tpu.vector_store %arg6[%c0_57, %c0_58], %63 {strides = array<i32>} : memref<64x128xf32, #tpu.memory_space<vmem>>, vector<64x128xf32>,
    %c1_i32 = arith.constant 1 : i32
    %65 = arith.addi %0, %c1_i32 : i32
    %c0_59 = arith.constant 0 : index
    %66 = arith.index_cast %65 : i32 to index
    %c0_60 = arith.constant 0 : index
    %c0_61 = arith.constant 0 : index
    %67 = vector.load %arg3[%c0_59, %66, %c0_60, %c0_61] : memref<1x36x9x128xbf16, #tpu.memory_space<vmem>>, vector<1x8x8x128xbf16>
    %68 = vector.shape_cast %67 : vector<1x8x8x128xbf16> to vector<8x8x128xbf16>
    %69 = vector.shape_cast %68 : vector<8x8x128xbf16> to vector<64x128xbf16>
    %c6 = arith.constant 6 : index
    %c0_62 = arith.constant 0 : index
    %c0_63 = arith.constant 0 : index
    %70 = vector.load %arg4[%c6, %c0_62, %c0_63] : memref<9x128x128xbf16, #tpu.memory_space<vmem>>, vector<1x128x128xbf16>
    %71 = vector.shape_cast %70 : vector<1x128x128xbf16> to vector<128x128xbf16>
    %cst_64 = arith.constant dense<0.000000e+00> : vector<64x128xf32>
    %72 = tpu.matmul %69, %71, %cst_64 {dimension_numbers = #tpu.dot_dimension_numbers<[1], [0], [0], [1], [0, 0, 1, 1], [], []>} : vector<64x128xbf16>, vector<128x128xbf16>, vector<64x128xf32> -> vector<64x128xf32>
    %c0_65 = arith.constant 0 : index
    %c0_66 = arith.constant 0 : index
    %73 = vector.load %arg6[%c0_65, %c0_66] : memref<64x128xf32, #tpu.memory_space<vmem>>, vector<64x128xf32>
    %74 = arith.addf %73, %72 : vector<64x128xf32>
    %c0_67 = arith.constant 0 : index
    %c0_68 = arith.constant 0 : index
    %75 = vector.load %arg6[%c0_67, %c0_68] : memref<64x128xf32, #tpu.memory_space<vmem>>, vector<64x128xf32>
    tpu.vector_store %arg6[%c0_67, %c0_68], %74 {strides = array<i32>} : memref<64x128xf32, #tpu.memory_space<vmem>>, vector<64x128xf32>,
    %c10_i32 = arith.constant 10 : i32
    %76 = arith.addi %0, %c10_i32 : i32
    %c0_69 = arith.constant 0 : index
    %77 = arith.index_cast %76 : i32 to index
    %c0_70 = arith.constant 0 : index
    %c0_71 = arith.constant 0 : index
    %78 = vector.load %arg3[%c0_69, %77, %c0_70, %c0_71] : memref<1x36x9x128xbf16, #tpu.memory_space<vmem>>, vector<1x8x8x128xbf16>
    %79 = vector.shape_cast %78 : vector<1x8x8x128xbf16> to vector<8x8x128xbf16>
    %80 = vector.shape_cast %79 : vector<8x8x128xbf16> to vector<64x128xbf16>
    %c7 = arith.constant 7 : index
    %c0_72 = arith.constant 0 : index
    %c0_73 = arith.constant 0 : index
    %81 = vector.load %arg4[%c7, %c0_72, %c0_73] : memref<9x128x128xbf16, #tpu.memory_space<vmem>>, vector<1x128x128xbf16>
    %82 = vector.shape_cast %81 : vector<1x128x128xbf16> to vector<128x128xbf16>
    %cst_74 = arith.constant dense<0.000000e+00> : vector<64x128xf32>
    %83 = tpu.matmul %80, %82, %cst_74 {dimension_numbers = #tpu.dot_dimension_numbers<[1], [0], [0], [1], [0, 0, 1, 1], [], []>} : vector<64x128xbf16>, vector<128x128xbf16>, vector<64x128xf32> -> vector<64x128xf32>
    %c0_75 = arith.constant 0 : index
    %c0_76 = arith.constant 0 : index
    %84 = vector.load %arg6[%c0_75, %c0_76] : memref<64x128xf32, #tpu.memory_space<vmem>>, vector<64x128xf32>
    %85 = arith.addf %84, %83 : vector<64x128xf32>
    %c0_77 = arith.constant 0 : index
    %c0_78 = arith.constant 0 : index
    %86 = vector.load %arg6[%c0_77, %c0_78] : memref<64x128xf32, #tpu.memory_space<vmem>>, vector<64x128xf32>
    tpu.vector_store %arg6[%c0_77, %c0_78], %85 {strides = array<i32>} : memref<64x128xf32, #tpu.memory_space<vmem>>, vector<64x128xf32>,
    %c1_i32_79 = arith.constant 1 : i32
    %87 = arith.addi %0, %c1_i32_79 : i32
    %c0_80 = arith.constant 0 : index
    %88 = arith.index_cast %87 : i32 to index
    %c1_81 = arith.constant 1 : index
    %c0_82 = arith.constant 0 : index
    %89 = vector.load %arg3[%c0_80, %88, %c1_81, %c0_82] : memref<1x36x9x128xbf16, #tpu.memory_space<vmem>>, vector<1x8x8x128xbf16>
    %90 = vector.shape_cast %89 : vector<1x8x8x128xbf16> to vector<8x8x128xbf16>
    %91 = vector.shape_cast %90 : vector<8x8x128xbf16> to vector<64x128xbf16>
    %c8 = arith.constant 8 : index
    %c0_83 = arith.constant 0 : index
    %c0_84 = arith.constant 0 : index
    %92 = vector.load %arg4[%c8, %c0_83, %c0_84] : memref<9x128x128xbf16, #tpu.memory_space<vmem>>, vector<1x128x128xbf16>
    %93 = vector.shape_cast %92 : vector<1x128x128xbf16> to vector<128x128xbf16>
    %cst_85 = arith.constant dense<0.000000e+00> : vector<64x128xf32>
    %94 = tpu.matmul %91, %93, %cst_85 {dimension_numbers = #tpu.dot_dimension_numbers<[1], [0], [0], [1], [0, 0, 1, 1], [], []>} : vector<64x128xbf16>, vector<128x128xbf16>, vector<64x128xf32> -> vector<64x128xf32>
    %c0_86 = arith.constant 0 : index
    %c0_87 = arith.constant 0 : index
    %95 = vector.load %arg6[%c0_86, %c0_87] : memref<64x128xf32, #tpu.memory_space<vmem>>, vector<64x128xf32>
    %96 = arith.addf %95, %94 : vector<64x128xf32>
    %c0_88 = arith.constant 0 : index
    %c0_89 = arith.constant 0 : index
    %97 = vector.load %arg6[%c0_88, %c0_89] : memref<64x128xf32, #tpu.memory_space<vmem>>, vector<64x128xf32>
    tpu.vector_store %arg6[%c0_88, %c0_89], %96 {strides = array<i32>} : memref<64x128xf32, #tpu.memory_space<vmem>>, vector<64x128xf32>,
    %c0_90 = arith.constant 0 : index
    %c0_91 = arith.constant 0 : index
    %98 = vector.load %arg6[%c0_90, %c0_91] : memref<64x128xf32, #tpu.memory_space<vmem>>, vector<64x128xf32>
    %99 = arith.truncf %98 : vector<64x128xf32> to vector<64x128xbf16>
    %c0_92 = arith.constant 0 : index
    %c0_93 = arith.constant 0 : index
    %c0_94 = arith.constant 0 : index
    %100 = vector.load %arg5[%c0_92, %c0_93, %c0_94] : memref<1x64x128xbf16, #tpu.memory_space<vmem>>, vector<1x64x128xbf16>
    %101 = vector.shape_cast %100 : vector<1x64x128xbf16> to vector<64x128xbf16>
    %102 = vector.shape_cast %99 : vector<64x128xbf16> to vector<1x64x128xbf16>
    tpu.vector_store %arg5[%c0_92, %c0_93, %c0_94], %102 {strides = array<i32>} : memref<1x64x128xbf16, #tpu.memory_space<vmem>>, vector<1x64x128xbf16>,
    return
  }
  func.func @transform_0(%arg0: i32, %arg1: i32, %arg2: i32) -> (i32, i32, i32, i32) {
    %c0_i32 = arith.constant 0 : i32
    %c0_i32_0 = arith.constant 0 : i32
    %c0_i32_1 = arith.constant 0 : i32
    %c0_i32_2 = arith.constant 0 : i32
    return %arg0, %c0_i32, %c0_i32_0, %c0_i32_1 : i32, i32, i32, i32
  }
  func.func @transform_1(%arg0: i32, %arg1: i32, %arg2: i32) -> (i32, i32, i32) {
    %c0_i32 = arith.constant 0 : i32
    %c0_i32_0 = arith.constant 0 : i32
    %c0_i32_1 = arith.constant 0 : i32
    return %c0_i32, %c0_i32_0, %arg2 : i32, i32, i32
  }
  func.func @transform_2(%arg0: i32, %arg1: i32, %arg2: i32) -> (i32, i32, i32) {
    %c0_i32 = arith.constant 0 : i32
    return %arg0, %arg1, %arg2 : i32, i32, i32
  }
}

</mosaic_0001>

<llo_original>
// kernel: tpu_custom_call.1
$region0: #{tpu_custom_call.1}
  #allocation0 [shape = 'u32[]', space=smem, size = 0x4, offset = 0x4, fixed_abs, tag = 'smem constant byte address 0x4 - core index']
  #allocation1 [shape = 'u32[144,128]{1,0:T(1,128)}', space=vmem, size = 0x12000, scoped, tag = 'internal scratch']
  #allocation2 [shape = 'f32[64,128]{1,0:T(8,128)}', space=vmem, size = 0x8000, scoped, tag = 'scratch operand']
  %s0 = inlined_call_operand.vmem [shape: bf16[2,36,9,128], index: 0, kind: input, shape index: {}]
  %s1 = inlined_call_operand.vmem [shape: bf16[9,128,128], index: 1, kind: input, shape index: {}]
  %s2 = inlined_call_operand.hbm [shape: bf16[2,64,128], index: 2, kind: output, shape index: {}]
  %s3 = sld [smem:[#allocation0]]
  $region41: #{tpu_custom_call.1} parent=0
    _
  %s5 = ssub.s32 1, %s3
  %s6 = scalar_select 0, %s5, %s3
  $region1: #{tpu_custom_call.1} parent=0
    #allocation3 [shape = 'u8[32768]{0}', space=vmem, size = 0x8000, scoped, tag = 'output window, operand 0']
    #allocation4 [shape = 's32[2]{0}', space=sflag, size = 0x8, scoped, tag = 'scoped memory for tpu_custom_call.1']
    %7 = vsyncpa [#allocation4], 0
    %s8 = scalar_lea.sflag [#allocation4], 1
    %9 = vsyncpa %s8, 0
    loop: start=0, step=1, limit=4
    $region2: #{tpu_custom_call.1} parent=1 // loop_pre_header
      _
    $region3: #{tpu_custom_call.1} parent=1 // loop_header
      %s11 = sphi 0, %s15
      %p12 = scmp.ge.s32.totalorder %s11, 4
      %s18 = sphi 0, %s37
      %s19 = sphi 0, %s33
      %s20 = sphi 0, %s29
      %s21 = sphi 0, %s18
      %s22 = sphi 0, %s19
      %s23 = sphi 0, %s20
      %s24 = sphi 0, %s21
      %s25 = sphi 0, %s22
      %s26 = sphi 0, %s23
      %s40 = sphi 0, %s42
      %s43 = sphi 0, %s40
      %s44 = sphi 0, %s43
      %s60 = sphi 0, %s44
      %s66 = sphi 0, %s68
      %s69 = sphi 0, %s66
      %s70 = sphi 0, %s69
      %s86 = sphi 0, %s70
      %s96 = sphi 0, %s98
      %s99 = sphi 0, %s96
      %s100 = sphi 0, %s99
      %s116 = sphi 0, %s100
    $region4: #{tpu_custom_call.1} parent=1 // loop_header_branch
      %14 = sbr.rel (%p12) target = $region8
    $region5: #{tpu_custom_call.1} parent=1 // loop_body
      %s16 = ssub.s32 %s11, 1
      %s17 = ssub.s32 %s11, 2
      %s27 = sadd.s32 1, %s20
      %p28 = scmp.ge.s32.totalorder %s27, 1
      %s29 = scalar_select %p28, 0, %s27
      %s30 = sadd.s32 1, %s19
      %s31 = scalar_select %p28, %s30, %s19
      %p32 = scmp.ge.s32.totalorder %s31, 1
      %s33 = scalar_select %p32, 0, %s31
      %s34 = sadd.s32 1, %s18
      %s35 = scalar_select %p32, %s34, %s18
      %p36 = scmp.ge.s32.totalorder %s35, 2
      %s37 = scalar_select %p36, 0, %s35
      %s38 = ssub.s32 %s18, %s37
      %p39 = scmp.eq.s32.totalorder %s38, 0
      %s41 = sadd.s32 %s40, 1
      %s42 = scalar_select %p39, %s40, %s41
      %p45 = pneg %p39
      %p46 = scmp.eq.s32.totalorder %s11, 1
      %p47 = por %p45, %p46
      %p48 = scmp.ne.s32.totalorder %s40, %s43
      %p49 = scmp.eq.s32.totalorder %s11, 0
      %p50 = por %p48, %p49
      %p51 = scmp.ne.s32.totalorder %s40, %s43
      %p52 = scmp.eq.s32.totalorder %s16, 1
      %p53 = por %p51, %p52
      %p54 = scmp.ne.s32.totalorder %s43, %s44
      %p55 = scmp.eq.s32.totalorder %s16, 0
      %p56 = por %p54, %p55
      %p57 = scmp.ne.s32.totalorder %s43, %s44
      %p58 = scmp.eq.s32.totalorder %s17, 1
      %p59 = por %p57, %p58
      %p61 = scmp.ne.s32.totalorder %s44, %s60
      %p62 = scmp.eq.s32.totalorder %s17, 0
      %p63 = por %p61, %p62
      %s64 = ssub.s32 %s20, %s29
      %p65 = scmp.eq.s32.totalorder %s64, 0
      %s67 = sadd.s32 %s66, 1
      %s68 = scalar_select %p65, %s66, %s67
      %p71 = pneg %p65
      %p72 = scmp.eq.s32.totalorder %s11, 1
      %p73 = por %p71, %p72
      %p74 = scmp.ne.s32.totalorder %s66, %s69
      %p75 = scmp.eq.s32.totalorder %s11, 0
      %p76 = por %p74, %p75
      %p77 = scmp.ne.s32.totalorder %s66, %s69
      %p78 = scmp.eq.s32.totalorder %s16, 1
      %p79 = por %p77, %p78
      %p80 = scmp.ne.s32.totalorder %s69, %s70
      %p81 = scmp.eq.s32.totalorder %s16, 0
      %p82 = por %p80, %p81
      %p83 = scmp.ne.s32.totalorder %s69, %s70
      %p84 = scmp.eq.s32.totalorder %s17, 1
      %p85 = por %p83, %p84
      %p87 = scmp.ne.s32.totalorder %s70, %s86
      %p88 = scmp.eq.s32.totalorder %s17, 0
      %p89 = por %p87, %p88
      %s90 = ssub.s32 %s18, %s37
      %s91 = ssub.s32 %s19, %s33
      %s92 = sor.u32 %s90, %s91
      %s93 = ssub.s32 %s20, %s29
      %s94 = sor.u32 %s92, %s93
      %p95 = scmp.eq.s32.totalorder %s94, 0
      %s97 = sadd.s32 %s96, 1
      %s98 = scalar_select %p95, %s96, %s97
      %p101 = pneg %p95
      %p102 = scmp.eq.s32.totalorder %s11, 1
      %p103 = por %p101, %p102
      %p104 = scmp.ne.s32.totalorder %s96, %s99
      %p105 = scmp.eq.s32.totalorder %s11, 0
      %p106 = por %p104, %p105
      %p107 = scmp.ne.s32.totalorder %s96, %s99
      %p108 = scmp.eq.s32.totalorder %s16, 1
      %p109 = por %p107, %p108
      %p110 = scmp.ne.s32.totalorder %s99, %s100
      %p111 = scmp.eq.s32.totalorder %s16, 0
      %p112 = por %p110, %p111
      %p113 = scmp.ne.s32.totalorder %s99, %s100
      %p114 = scmp.eq.s32.totalorder %s17, 1
      %p115 = por %p113, %p114
      %p117 = scmp.ne.s32.totalorder %s100, %s116
      %p118 = scmp.eq.s32.totalorder %s17, 0
      %p119 = por %p117, %p118
      %p120 = scmp.le.s32.totalorder 1, %s11
      %p121 = scmp.lt.s32.totalorder %s11, 3
      %p122 = pnand %p120, %p121
      %p123 = pneg %p122
      // Predicated region
      $region9: #{tpu_custom_call.1} parent=5 // pred_check
        _
      $region10: #{tpu_custom_call.1} parent=5 // pred_check_branch
        %125 = sbr.rel (%p122) target = $region12
      $region11: #{tpu_custom_call.1} parent=5 // pred_region
        %s126 = ssub.s32 %s11, 1
        // Predicated region
        $region13: #{tpu_custom_call.1} parent=11 // pred_check
          %p127 = pneg %p82
        $region14: #{tpu_custom_call.1} parent=11 // pred_check_branch
          %129 = sbr.rel (%p127) target = $region16
        $region15: #{tpu_custom_call.1} parent=11 // pred_region
          %p130 = scmp.lt.s32.totalorder %s23, 0
          %s131 = scalar_select %p130, %s23, 0
          %s132 = smul.addr %s131, 4
          %s133 = scalar_lea.vmem %s1, %s132
        $region16: #{tpu_custom_call.1} parent=11 // pred_fallthru
          _
      $region12: #{tpu_custom_call.1} parent=5 // pred_fallthru
        _
      %p134 = scmp.lt.s32.totalorder %s11, 2
      // Predicated region
      $region17: #{tpu_custom_call.1} parent=5 // pred_check
        %p135 = pneg %p134
      $region18: #{tpu_custom_call.1} parent=5 // pred_check_branch
        %137 = sbr.rel (%p135) target = $region20
      $region19: #{tpu_custom_call.1} parent=5 // pred_region
        // Predicated region
        $region21: #{tpu_custom_call.1} parent=19 // pred_check
          %p138 = pneg %p50
        $region22: #{tpu_custom_call.1} parent=19 // pred_check_branch
          %140 = sbr.rel (%p138) target = $region24
        $region23: #{tpu_custom_call.1} parent=19 // pred_region
          %p141 = scmp.lt.s32.totalorder %s18, 1
          %s142 = scalar_select %p141, %s18, 1
          %s143 = smul.addr %s142, 72
          %s144 = smul.addr %s143, 4
          %s145 = scalar_lea.vmem %s0, %s144
        $region24: #{tpu_custom_call.1} parent=19 // pred_fallthru
          _
      $region20: #{tpu_custom_call.1} parent=5 // pred_fallthru
        _
      %p146 = scmp.le.s32.totalorder 1, %s11
      %p147 = scmp.lt.s32.totalorder %s11, 3
      %p148 = pnand %p146, %p147
      %p149 = pneg %p148
      // Predicated region
      $region25: #{tpu_custom_call.1} parent=5 // pred_check
        _
      $region26: #{tpu_custom_call.1} parent=5 // pred_check_branch
        %151 = sbr.rel (%p148) target = $region28
      $region27: #{tpu_custom_call.1} parent=5 // pred_region
        %s152 = ssub.s32 %s11, 1
        %p153 = scmp.lt.s32.totalorder %s21, 1
        %s154 = scalar_select %p153, %s21, 1
        %s155 = smul.addr %s154, 72
        %s156 = smul.addr %s155, 4
        %s157 = scalar_lea.vmem %s0, %s156
        %p158 = pneg %p56
        %p159 = pneg %p53
        %p160 = scmp.lt.s32.totalorder %s23, 0
        %s161 = scalar_select %p160, %s23, 0
        %s162 = smul.addr %s161, 4
        %s163 = scalar_lea.vmem %s1, %s162
        %p164 = pneg %p82
        %p165 = pneg %p79
        %p166 = pneg %p112
        %p167 = pneg %p109
        %s168 = sand.u32 %s99, 1
        %s169 = scalar_lea.sflag [#allocation4], %s168
        %s170 = sand.u32 %s99, 1
        %s171 = smul.addr %s170, 32
        %s172 = scalar_lea.vmem [#allocation3], %s171
        %p173 = scmp.lt.s32.totalorder %s21, 1
        %s174 = scalar_select %p173, %s21, 1
        %s175 = smul.addr %s174, 72
        %s176 = smul.addr %s175, 4
        %s177 = scalar_lea.vmem %s0, %s176
        %p178 = scmp.lt.s32.totalorder %s23, 0
        %s179 = scalar_select %p178, %s23, 0
        %s180 = smul.addr %s179, 4
        %s181 = scalar_lea.vmem %s1, %s180
        %s182 = smul.u32 8, %s22
        %s184 = smul.u32 %s22, 8
        %s185 = smul.u32 %s184, 2
        %s186 = smul.addr %s185, 4
        %s187 = scalar_lea.vmem %s177, %s186
        %v188 = vld [vmem:[%s187] sm:$0xf]
        %v189 = vld [vmem:[%s187 + $0x8] sm:$0xf]
        %v190 = vld [vmem:[%s187 + $0x10] sm:$0xf]
        %v191 = vld [vmem:[%s187 + $0x18] sm:$0xf]
        %v192 = vld [vmem:[%s187 + $0x20] sm:$0xf]
        %v193 = vld [vmem:[%s187 + $0x28] sm:$0xf]
        %v194 = vld [vmem:[%s187 + $0x30] sm:$0xf]
        %v195 = vld [vmem:[%s187 + $0x38] sm:$0xf]
        %v196 = vld [vmem:[%s181] sm:$0xf]
        %v197 = vld [vmem:[%s181 + $0x4] sm:$0xf]
        %v198 = vld [vmem:[%s181 + $0x8] sm:$0xf]
        %v199 = vld [vmem:[%s181 + $0xc] sm:$0xf]
        %v200 = vld [vmem:[%s181 + $0x10] sm:$0xf]
        %v201 = vld [vmem:[%s181 + $0x14] sm:$0xf]
        %v202 = vld [vmem:[%s181 + $0x18] sm:$0xf]
        %v203 = vld [vmem:[%s181 + $0x1c] sm:$0xf]
        %v204 = vld [vmem:[%s181 + $0x20] sm:$0xf]
        %v205 = vld [vmem:[%s181 + $0x24] sm:$0xf]
        %v206 = vld [vmem:[%s181 + $0x28] sm:$0xf]
        %v207 = vld [vmem:[%s181 + $0x2c] sm:$0xf]
        %v208 = vld [vmem:[%s181 + $0x30] sm:$0xf]
        %v209 = vld [vmem:[%s181 + $0x34] sm:$0xf]
        %v210 = vld [vmem:[%s181 + $0x38] sm:$0xf]
        %v211 = vld [vmem:[%s181 + $0x3c] sm:$0xf]
        %v220 = vunpack.c.l.b16 %v188
        %v221 = vunpack.c.l.b16 %v189
        %v222 = vunpack.c.l.b16 %v190
        %v223 = vunpack.c.l.b16 %v191
        %v224 = vunpack.c.l.b16 %v192
        %v225 = vunpack.c.l.b16 %v193
        %v226 = vunpack.c.l.b16 %v194
        %v227 = vunpack.c.l.b16 %v195
        %v228 = vpack.c.b16 %v221, %v220
        %v229 = vpack.c.b16 %v223, %v222
        %v230 = vpack.c.b16 %v225, %v224
        %v231 = vpack.c.b16 %v227, %v226
        %v252 = vunpack.c.l.b16 %v196
        %v253 = vunpack.c.l.b16 %v197
        %v254 = vunpack.c.l.b16 %v198
        %v255 = vunpack.c.l.b16 %v199
        %v256 = vunpack.c.l.b16 %v200
        %v257 = vunpack.c.l.b16 %v201
        %v258 = vunpack.c.l.b16 %v202
        %v259 = vunpack.c.l.b16 %v203
        %v260 = vunpack.c.l.b16 %v204
        %v261 = vunpack.c.l.b16 %v205
        %v262 = vunpack.c.l.b16 %v206
        %v263 = vunpack.c.l.b16 %v207
        %v264 = vunpack.c.l.b16 %v208
        %v265 = vunpack.c.l.b16 %v209
        %v266 = vunpack.c.l.b16 %v210
        %v267 = vunpack.c.l.b16 %v211
        %v268 = vpack.c.b16 %v253, %v252
        %v269 = vpack.c.b16 %v255, %v254
        %v270 = vpack.c.b16 %v257, %v256
        %v271 = vpack.c.b16 %v259, %v258
        %v272 = vpack.c.b16 %v261, %v260
        %v273 = vpack.c.b16 %v263, %v262
        %v274 = vpack.c.b16 %v265, %v264
        %v275 = vpack.c.b16 %v267, %v266
        %284 = vmatprep.subr.bf16.mxu0 0
        %285 = vmatpush1.bf16.msra.mxu0 %v275
        %286 = vmatprep.subr.bf16.mxu0 0
        %287 = vmatpush1.bf16.msra.mxu0 %v274
        %288 = vmatprep.subr.bf16.mxu0 0
        %289 = vmatpush1.bf16.msra.mxu0 %v273
        %290 = vmatprep.subr.bf16.mxu0 0
        %291 = vmatpush1.bf16.msra.mxu0 %v272
        %292 = vmatprep.subr.bf16.mxu0 0
        %293 = vmatpush1.bf16.msra.mxu0 %v271
        %294 = vmatprep.subr.bf16.mxu0 0
        %295 = vmatpush1.bf16.msra.mxu0 %v270
        %296 = vmatprep.subr.bf16.mxu0 0
        %297 = vmatpush1.bf16.msra.mxu0 %v269
        %298 = vmatprep.subr.bf16.mxu0 0
        %299 = vmatpush1.bf16.msra.mxu0 %v268
        %300 = vmatprep.subr.bf16.mxu0 0
        %301 = vmatpush2.bf16.msra.mxu0 0
        %302 = vmatprep.subr.bf16.mxu0 0
        %303 = vmatpush2.bf16.msra.mxu0 0
        %304 = vmatprep.subr.bf16.mxu0 0
        %305 = vmatpush2.bf16.msra.mxu0 0
        %306 = vmatprep.subr.bf16.mxu0 0
        %307 = vmatpush2.bf16.msra.mxu0 0
        %308 = vmatprep.subr.bf16.mxu0 0
        %309 = vmatpush2.bf16.msra.mxu0 0
        %310 = vmatprep.subr.bf16.mxu0 0
        %311 = vmatpush2.bf16.msra.mxu0 0
        %312 = vmatprep.subr.bf16.mxu0 0
        %313 = vmatpush2.bf16.msra.mxu0 0
        %314 = vmatprep.subr.bf16.mxu0 0
        %315 = vmatpush2.bf16.msra.mxu0 0
        %316 = vmatprep.mubr.bf16.mxu0 0
        %317 = vmatmul.mubr.bf16.gmra.mxu0 %v228
        %v318 = vpop.f32.mrf.mxu0
        %v319 = vadd.f32 0.0, %v318
        %v320 = vpop.f32.mrf.mxu0
        %v321 = vpop.f32.mrf.mxu0
        %v322 = vadd.f32 0.0, %v321
        %v323 = vpop.f32.mrf.mxu0
        %324 = vmatprep.mubr.bf16.mxu0 0
        %325 = vmatmul.mubr.bf16.gmra.mxu0 %v229
        %v326 = vpop.f32.mrf.mxu0
        %v327 = vadd.f32 0.0, %v326
        %v328 = vpop.f32.mrf.mxu0
        %v329 = vpop.f32.mrf.mxu0
        %v330 = vadd.f32 0.0, %v329
        %v331 = vpop.f32.mrf.mxu0
        %332 = vmatprep.mubr.bf16.mxu0 0
        %333 = vmatmul.mubr.bf16.gmra.mxu0 %v230
        %v334 = vpop.f32.mrf.mxu0
        %v335 = vadd.f32 0.0, %v334
        %v336 = vpop.f32.mrf.mxu0
        %v337 = vpop.f32.mrf.mxu0
        %v338 = vadd.f32 0.0, %v337
        %v339 = vpop.f32.mrf.mxu0
        %340 = vmatprep.mubr.bf16.mxu0 0
        %341 = vmatmul.mubr.bf16.gmra.mxu0 %v231
        %v342 = vpop.f32.mrf.mxu0
        %v343 = vadd.f32 0.0, %v342
        %v344 = vpop.f32.mrf.mxu0
        %v345 = vpop.f32.mrf.mxu0
        %v346 = vadd.f32 0.0, %v345
        %v347 = vpop.f32.mrf.mxu0
        %348 = vdwg.mxu0
        %349 = vst [vmem:[#allocation2] sm:$0xff] %v319
        %350 = vst [vmem:[#allocation2 + $0x8] sm:$0xff] %v322
        %351 = vst [vmem:[#allocation2 + $0x10] sm:$0xff] %v327
        %352 = vst [vmem:[#allocation2 + $0x18] sm:$0xff] %v330
        %353 = vst [vmem:[#allocation2 + $0x20] sm:$0xff] %v335
        %354 = vst [vmem:[#allocation2 + $0x28] sm:$0xff] %v338
        %355 = vst [vmem:[#allocation2 + $0x30] sm:$0xff] %v343
        %356 = vst [vmem:[#allocation2 + $0x38] sm:$0xff] %v346
        %s357 = sadd.s32 %s184, 9
        %s358 = smul.u32 %s357, 2
        %s359 = smul.addr %s358, 4
        %s360 = scalar_lea.vmem %s177, %s359
        %v361 = vld [vmem:[%s360] sm:$0xf]
        %v362 = vld [vmem:[%s360 + $0x8] sm:$0xf]
        %v363 = vld [vmem:[%s360 + $0x10] sm:$0xf]
        %v364 = vld [vmem:[%s360 + $0x18] sm:$0xf]
        %v365 = vld [vmem:[%s360 + $0x20] sm:$0xf]
        %v366 = vld [vmem:[%s360 + $0x28] sm:$0xf]
        %v367 = vld [vmem:[%s360 + $0x30] sm:$0xf]
        %v368 = vld [vmem:[%s360 + $0x38] sm:$0xf]
        %s369 = scalar_lea.vmem %s181, 64
        %v370 = vld [vmem:[%s369] sm:$0xf]
        %v371 = vld [vmem:[%s369 + $0x4] sm:$0xf]
        %v372 = vld [vmem:[%s369 + $0x8] sm:$0xf]
        %v373 = vld [vmem:[%s369 + $0xc] sm:$0xf]
        %v374 = vld [vmem:[%s369 + $0x10] sm:$0xf]
        %v375 = vld [vmem:[%s369 + $0x14] sm:$0xf]
        %v376 = vld [vmem:[%s369 + $0x18] sm:$0xf]
        %v377 = vld [vmem:[%s369 + $0x1c] sm:$0xf]
        %v378 = vld [vmem:[%s369 + $0x20] sm:$0xf]
        %v379 = vld [vmem:[%s369 + $0x24] sm:$0xf]
        %v380 = vld [vmem:[%s369 + $0x28] sm:$0xf]
        %v381 = vld [vmem:[%s369 + $0x2c] sm:$0xf]
        %v382 = vld [vmem:[%s369 + $0x30] sm:$0xf]
        %v383 = vld [vmem:[%s369 + $0x34] sm:$0xf]
        %v384 = vld [vmem:[%s369 + $0x38] sm:$0xf]
        %v385 = vld [vmem:[%s369 + $0x3c] sm:$0xf]
        %v394 = vunpack.c.l.b16 %v361
        %v395 = vunpack.c.l.b16 %v362
        %v396 = vunpack.c.l.b16 %v363
        %v397 = vunpack.c.l.b16 %v364
        %v398 = vunpack.c.l.b16 %v365
        %v399 = vunpack.c.l.b16 %v366
        %v400 = vunpack.c.l.b16 %v367
        %v401 = vunpack.c.l.b16 %v368
        %v402 = vpack.c.b16 %v395, %v394
        %v403 = vpack.c.b16 %v397, %v396
        %v404 = vpack.c.b16 %v399, %v398
        %v405 = vpack.c.b16 %v401, %v400
        %v426 = vunpack.c.l.b16 %v370
        %v427 = vunpack.c.l.b16 %v371
        %v428 = vunpack.c.l.b16 %v372
        %v429 = vunpack.c.l.b16 %v373
        %v430 = vunpack.c.l.b16 %v374
        %v431 = vunpack.c.l.b16 %v375
        %v432 = vunpack.c.l.b16 %v376
        %v433 = vunpack.c.l.b16 %v377
        %v434 = vunpack.c.l.b16 %v378
        %v435 = vunpack.c.l.b16 %v379
        %v436 = vunpack.c.l.b16 %v380
        %v437 = vunpack.c.l.b16 %v381
        %v438 = vunpack.c.l.b16 %v382
        %v439 = vunpack.c.l.b16 %v383
        %v440 = vunpack.c.l.b16 %v384
        %v441 = vunpack.c.l.b16 %v385
        %v442 = vpack.c.b16 %v427, %v426
        %v443 = vpack.c.b16 %v429, %v428
        %v444 = vpack.c.b16 %v431, %v430
        %v445 = vpack.c.b16 %v433, %v432
        %v446 = vpack.c.b16 %v435, %v434
        %v447 = vpack.c.b16 %v437, %v436
        %v448 = vpack.c.b16 %v439, %v438
        %v449 = vpack.c.b16 %v441, %v440
        %458 = vmatprep.subr.bf16.mxu0 0
        %459 = vmatpush1.bf16.msra.mxu0 %v449
        %460 = vmatprep.subr.bf16.mxu0 0
        %461 = vmatpush1.bf16.msra.mxu0 %v448
        %462 = vmatprep.subr.bf16.mxu0 0
        %463 = vmatpush1.bf16.msra.mxu0 %v447
        %464 = vmatprep.subr.bf16.mxu0 0
        %465 = vmatpush1.bf16.msra.mxu0 %v446
        %466 = vmatprep.subr.bf16.mxu0 0
        %467 = vmatpush1.bf16.msra.mxu0 %v445
        %468 = vmatprep.subr.bf16.mxu0 0
        %469 = vmatpush1.bf16.msra.mxu0 %v444
        %470 = vmatprep.subr.bf16.mxu0 0
        %471 = vmatpush1.bf16.msra.mxu0 %v443
        %472 = vmatprep.subr.bf16.mxu0 0
        %473 = vmatpush1.bf16.msra.mxu0 %v442
        %474 = vmatprep.subr.bf16.mxu0 0
        %475 = vmatpush2.bf16.msra.mxu0 0
        %476 = vmatprep.subr.bf16.mxu0 0
        %477 = vmatpush2.bf16.msra.mxu0 0
        %478 = vmatprep.subr.bf16.mxu0 0
        %479 = vmatpush2.bf16.msra.mxu0 0
        %480 = vmatprep.subr.bf16.mxu0 0
        %481 = vmatpush2.bf16.msra.mxu0 0
        %482 = vmatprep.subr.bf16.mxu0 0
        %483 = vmatpush2.bf16.msra.mxu0 0
        %484 = vmatprep.subr.bf16.mxu0 0
        %485 = vmatpush2.bf16.msra.mxu0 0
        %486 = vmatprep.subr.bf16.mxu0 0
        %487 = vmatpush2.bf16.msra.mxu0 0
        %488 = vmatprep.subr.bf16.mxu0 0
        %489 = vmatpush2.bf16.msra.mxu0 0
        %490 = vmatprep.mubr.bf16.mxu0 0
        %491 = vmatmul.mubr.bf16.gmra.mxu0 %v402
        %v492 = vpop.f32.mrf.mxu0
        %v493 = vadd.f32 0.0, %v492
        %v494 = vpop.f32.mrf.mxu0
        %v495 = vpop.f32.mrf.mxu0
        %v496 = vadd.f32 0.0, %v495
        %v497 = vpop.f32.mrf.mxu0
        %498 = vmatprep.mubr.bf16.mxu0 0
        %499 = vmatmul.mubr.bf16.gmra.mxu0 %v403
        %v500 = vpop.f32.mrf.mxu0
        %v501 = vadd.f32 0.0, %v500
        %v502 = vpop.f32.mrf.mxu0
        %v503 = vpop.f32.mrf.mxu0
        %v504 = vadd.f32 0.0, %v503
        %v505 = vpop.f32.mrf.mxu0
        %506 = vmatprep.mubr.bf16.mxu0 0
        %507 = vmatmul.mubr.bf16.gmra.mxu0 %v404
        %v508 = vpop.f32.mrf.mxu0
        %v509 = vadd.f32 0.0, %v508
        %v510 = vpop.f32.mrf.mxu0
        %v511 = vpop.f32.mrf.mxu0
        %v512 = vadd.f32 0.0, %v511
        %v513 = vpop.f32.mrf.mxu0
        %514 = vmatprep.mubr.bf16.mxu0 0
        %515 = vmatmul.mubr.bf16.gmra.mxu0 %v405
        %v516 = vpop.f32.mrf.mxu0
        %v517 = vadd.f32 0.0, %v516
        %v518 = vpop.f32.mrf.mxu0
        %v519 = vpop.f32.mrf.mxu0
        %v520 = vadd.f32 0.0, %v519
        %v521 = vpop.f32.mrf.mxu0
        %522 = vdwg.mxu0
        %v523 = vld [vmem:[#allocation2] sm:$0xff]
        %v524 = vld [vmem:[#allocation2 + $0x8] sm:$0xff]
        %v525 = vld [vmem:[#allocation2 + $0x10] sm:$0xff]
        %v526 = vld [vmem:[#allocation2 + $0x18] sm:$0xff]
        %v527 = vld [vmem:[#allocation2 + $0x20] sm:$0xff]
        %v528 = vld [vmem:[#allocation2 + $0x28] sm:$0xff]
        %v529 = vld [vmem:[#allocation2 + $0x30] sm:$0xff]
        %v530 = vld [vmem:[#allocation2 + $0x38] sm:$0xff]
        %v531 = vadd.f32 %v523, %v493
        %v532 = vadd.f32 %v524, %v496
        %v533 = vadd.f32 %v525, %v501
        %v534 = vadd.f32 %v526, %v504
        %v535 = vadd.f32 %v527, %v509
        %v536 = vadd.f32 %v528, %v512
        %v537 = vadd.f32 %v529, %v517
        %v538 = vadd.f32 %v530, %v520
        %539 = vst [vmem:[#allocation2] sm:$0xff] %v531
        %540 = vst [vmem:[#allocation2 + $0x8] sm:$0xff] %v532
        %541 = vst [vmem:[#allocation2 + $0x10] sm:$0xff] %v533
        %542 = vst [vmem:[#allocation2 + $0x18] sm:$0xff] %v534
        %543 = vst [vmem:[#allocation2 + $0x20] sm:$0xff] %v535
        %544 = vst [vmem:[#allocation2 + $0x28] sm:$0xff] %v536
        %545 = vst [vmem:[#allocation2 + $0x30] sm:$0xff] %v537
        %546 = vst [vmem:[#allocation2 + $0x38] sm:$0xff] %v538
        %v547 = vld [vmem:[%s187] sm:$0xf]
        %v548 = vld [vmem:[%s187 + $0x4] sm:$0x1]
        %v549 = vld [vmem:[%s187 + $0x8] sm:$0xf]
        %v550 = vld [vmem:[%s187 + $0xc] sm:$0x1]
        %v551 = vld [vmem:[%s187 + $0x10] sm:$0xf]
        %v552 = vld [vmem:[%s187 + $0x14] sm:$0x1]
        %v553 = vld [vmem:[%s187 + $0x18] sm:$0xf]
        %v554 = vld [vmem:[%s187 + $0x1c] sm:$0x1]
        %v555 = vld [vmem:[%s187 + $0x20] sm:$0xf]
        %v556 = vld [vmem:[%s187 + $0x24] sm:$0x1]
        %v557 = vld [vmem:[%s187 + $0x28] sm:$0xf]
        %v558 = vld [vmem:[%s187 + $0x2c] sm:$0x1]
        %v559 = vld [vmem:[%s187 + $0x30] sm:$0xf]
        %v560 = vld [vmem:[%s187 + $0x34] sm:$0x1]
        %v561 = vld [vmem:[%s187 + $0x38] sm:$0xf]
        %v562 = vld [vmem:[%s187 + $0x3c] sm:$0x1]
        %vm563 = vsmask.f32 3328
        %vm564 = vsmask.f32 7440
        %vm565 = vmor %vm563, %vm564
        %v567 = vshrl.u32 %v547, 16
        %v569 = vrot.slane %v567, 4
        %v570 = vshll.u32 %v547, 16
        %v572 = vrot.slane %v570, 5
        %v573 = vor.u32 %v569, %v572
        %v574 = vrot.slane %v573, 4
        %v576 = vshll.u32 %v548, 16
        %v578 = vrot.slane %v576, 5
        %v579 = vsel %vm565, %v574, %v578
        %v581 = vshrl.u32 %v549, 16
        %v583 = vrot.slane %v581, 4
        %v584 = vshll.u32 %v549, 16
        %v586 = vrot.slane %v584, 5
        %v587 = vor.u32 %v583, %v586
        %v588 = vrot.slane %v587, 4
        %v590 = vshll.u32 %v550, 16
        %v592 = vrot.slane %v590, 5
        %v593 = vsel %vm565, %v588, %v592
        %v595 = vshrl.u32 %v551, 16
        %v597 = vrot.slane %v595, 4
        %v598 = vshll.u32 %v551, 16
        %v600 = vrot.slane %v598, 5
        %v601 = vor.u32 %v597, %v600
        %v602 = vrot.slane %v601, 4
        %v604 = vshll.u32 %v552, 16
        %v606 = vrot.slane %v604, 5
        %v607 = vsel %vm565, %v602, %v606
        %v609 = vshrl.u32 %v553, 16
        %v611 = vrot.slane %v609, 4
        %v612 = vshll.u32 %v553, 16
        %v614 = vrot.slane %v612, 5
        %v615 = vor.u32 %v611, %v614
        %v616 = vrot.slane %v615, 4
        %v618 = vshll.u32 %v554, 16
        %v620 = vrot.slane %v618, 5
        %v621 = vsel %vm565, %v616, %v620
        %v623 = vshrl.u32 %v555, 16
        %v625 = vrot.slane %v623, 4
        %v626 = vshll.u32 %v555, 16
        %v628 = vrot.slane %v626, 5
        %v629 = vor.u32 %v625, %v628
        %v630 = vrot.slane %v629, 4
        %v632 = vshll.u32 %v556, 16
        %v634 = vrot.slane %v632, 5
        %v635 = vsel %vm565, %v630, %v634
        %v637 = vshrl.u32 %v557, 16
        %v639 = vrot.slane %v637, 4
        %v640 = vshll.u32 %v557, 16
        %v642 = vrot.slane %v640, 5
        %v643 = vor.u32 %v639, %v642
        %v644 = vrot.slane %v643, 4
        %v646 = vshll.u32 %v558, 16
        %v648 = vrot.slane %v646, 5
        %v649 = vsel %vm565, %v644, %v648
        %v651 = vshrl.u32 %v559, 16
        %v653 = vrot.slane %v651, 4
        %v654 = vshll.u32 %v559, 16
        %v656 = vrot.slane %v654, 5
        %v657 = vor.u32 %v653, %v656
        %v658 = vrot.slane %v657, 4
        %v660 = vshll.u32 %v560, 16
        %v662 = vrot.slane %v660, 5
        %v663 = vsel %vm565, %v658, %v662
        %v665 = vshrl.u32 %v561, 16
        %v667 = vrot.slane %v665, 4
        %v668 = vshll.u32 %v561, 16
        %v670 = vrot.slane %v668, 5
        %v671 = vor.u32 %v667, %v670
        %v672 = vrot.slane %v671, 4
        %v674 = vshll.u32 %v562, 16
        %v676 = vrot.slane %v674, 5
        %v677 = vsel %vm565, %v672, %v676
        %s678 = scalar_lea.vmem %s181, 128
        %v679 = vld [vmem:[%s678] sm:$0xf]
        %v680 = vld [vmem:[%s678 + $0x4] sm:$0xf]
        %v681 = vld [vmem:[%s678 + $0x8] sm:$0xf]
        %v682 = vld [vmem:[%s678 + $0xc] sm:$0xf]
        %v683 = vld [vmem:[%s678 + $0x10] sm:$0xf]
        %v684 = vld [vmem:[%s678 + $0x14] sm:$0xf]
        %v685 = vld [vmem:[%s678 + $0x18] sm:$0xf]
        %v686 = vld [vmem:[%s678 + $0x1c] sm:$0xf]
        %v687 = vld [vmem:[%s678 + $0x20] sm:$0xf]
        %v688 = vld [vmem:[%s678 + $0x24] sm:$0xf]
        %v689 = vld [vmem:[%s678 + $0x28] sm:$0xf]
        %v690 = vld [vmem:[%s678 + $0x2c] sm:$0xf]
        %v691 = vld [vmem:[%s678 + $0x30] sm:$0xf]
        %v692 = vld [vmem:[%s678 + $0x34] sm:$0xf]
        %v693 = vld [vmem:[%s678 + $0x38] sm:$0xf]
        %v694 = vld [vmem:[%s678 + $0x3c] sm:$0xf]
        %v695 = vunpack.c.l.b16 %v579
        %v696 = vunpack.c.l.b16 %v593
        %v697 = vunpack.c.l.b16 %v607
        %v698 = vunpack.c.l.b16 %v621
        %v699 = vunpack.c.l.b16 %v635
        %v700 = vunpack.c.l.b16 %v649
        %v701 = vunpack.c.l.b16 %v663
        %v702 = vunpack.c.l.b16 %v677
        %v703 = vpack.c.b16 %v696, %v695
        %v704 = vpack.c.b16 %v698, %v697
        %v705 = vpack.c.b16 %v700, %v699
        %v706 = vpack.c.b16 %v702, %v701
        %v727 = vunpack.c.l.b16 %v679
        %v728 = vunpack.c.l.b16 %v680
        %v729 = vunpack.c.l.b16 %v681
        %v730 = vunpack.c.l.b16 %v682
        %v731 = vunpack.c.l.b16 %v683
        %v732 = vunpack.c.l.b16 %v684
        %v733 = vunpack.c.l.b16 %v685
        %v734 = vunpack.c.l.b16 %v686
        %v735 = vunpack.c.l.b16 %v687
        %v736 = vunpack.c.l.b16 %v688
        %v737 = vunpack.c.l.b16 %v689
        %v738 = vunpack.c.l.b16 %v690
        %v739 = vunpack.c.l.b16 %v691
        %v740 = vunpack.c.l.b16 %v692
        %v741 = vunpack.c.l.b16 %v693
        %v742 = vunpack.c.l.b16 %v694
        %v743 = vpack.c.b16 %v728, %v727
        %v744 = vpack.c.b16 %v730, %v729
        %v745 = vpack.c.b16 %v732, %v731
        %v746 = vpack.c.b16 %v734, %v733
        %v747 = vpack.c.b16 %v736, %v735
        %v748 = vpack.c.b16 %v738, %v737
        %v749 = vpack.c.b16 %v740, %v739
        %v750 = vpack.c.b16 %v742, %v741
        %759 = vmatprep.subr.bf16.mxu0 0
        %760 = vmatpush1.bf16.msra.mxu0 %v750
        %761 = vmatprep.subr.bf16.mxu0 0
        %762 = vmatpush1.bf16.msra.mxu0 %v749
        %763 = vmatprep.subr.bf16.mxu0 0
        %764 = vmatpush1.bf16.msra.mxu0 %v748
        %765 = vmatprep.subr.bf16.mxu0 0
        %766 = vmatpush1.bf16.msra.mxu0 %v747
        %767 = vmatprep.subr.bf16.mxu0 0
        %768 = vmatpush1.bf16.msra.mxu0 %v746
        %769 = vmatprep.subr.bf16.mxu0 0
        %770 = vmatpush1.bf16.msra.mxu0 %v745
        %771 = vmatprep.subr.bf16.mxu0 0
        %772 = vmatpush1.bf16.msra.mxu0 %v744
        %773 = vmatprep.subr.bf16.mxu0 0
        %774 = vmatpush1.bf16.msra.mxu0 %v743
        %775 = vmatprep.subr.bf16.mxu0 0
        %776 = vmatpush2.bf16.msra.mxu0 0
        %777 = vmatprep.subr.bf16.mxu0 0
        %778 = vmatpush2.bf16.msra.mxu0 0
        %779 = vmatprep.subr.bf16.mxu0 0
        %780 = vmatpush2.bf16.msra.mxu0 0
        %781 = vmatprep.subr.bf16.mxu0 0
        %782 = vmatpush2.bf16.msra.mxu0 0
        %783 = vmatprep.subr.bf16.mxu0 0
        %784 = vmatpush2.bf16.msra.mxu0 0
        %785 = vmatprep.subr.bf16.mxu0 0
        %786 = vmatpush2.bf16.msra.mxu0 0
        %787 = vmatprep.subr.bf16.mxu0 0
        %788 = vmatpush2.bf16.msra.mxu0 0
        %789 = vmatprep.subr.bf16.mxu0 0
        %790 = vmatpush2.bf16.msra.mxu0 0
        %791 = vmatprep.mubr.bf16.mxu0 0
        %792 = vmatmul.mubr.bf16.gmra.mxu0 %v703
        %v793 = vpop.f32.mrf.mxu0
        %v794 = vadd.f32 0.0, %v793
        %v795 = vpop.f32.mrf.mxu0
        %v796 = vpop.f32.mrf.mxu0
        %v797 = vadd.f32 0.0, %v796
        %v798 = vpop.f32.mrf.mxu0
        %799 = vmatprep.mubr.bf16.mxu0 0
        %800 = vmatmul.mubr.bf16.gmra.mxu0 %v704
        %v801 = vpop.f32.mrf.mxu0
        %v802 = vadd.f32 0.0, %v801
        %v803 = vpop.f32.mrf.mxu0
        %v804 = vpop.f32.mrf.mxu0
        %v805 = vadd.f32 0.0, %v804
        %v806 = vpop.f32.mrf.mxu0
        %807 = vmatprep.mubr.bf16.mxu0 0
        %808 = vmatmul.mubr.bf16.gmra.mxu0 %v705
        %v809 = vpop.f32.mrf.mxu0
        %v810 = vadd.f32 0.0, %v809
        %v811 = vpop.f32.mrf.mxu0
        %v812 = vpop.f32.mrf.mxu0
        %v813 = vadd.f32 0.0, %v812
        %v814 = vpop.f32.mrf.mxu0
        %815 = vmatprep.mubr.bf16.mxu0 0
        %816 = vmatmul.mubr.bf16.gmra.mxu0 %v706
        %v817 = vpop.f32.mrf.mxu0
        %v818 = vadd.f32 0.0, %v817
        %v819 = vpop.f32.mrf.mxu0
        %v820 = vpop.f32.mrf.mxu0
        %v821 = vadd.f32 0.0, %v820
        %v822 = vpop.f32.mrf.mxu0
        %823 = vdwg.mxu0
        %v824 = vld [vmem:[#allocation2] sm:$0xff]
        %v825 = vld [vmem:[#allocation2 + $0x8] sm:$0xff]
        %v826 = vld [vmem:[#allocation2 + $0x10] sm:$0xff]
        %v827 = vld [vmem:[#allocation2 + $0x18] sm:$0xff]
        %v828 = vld [vmem:[#allocation2 + $0x20] sm:$0xff]
        %v829 = vld [vmem:[#allocation2 + $0x28] sm:$0xff]
        %v830 = vld [vmem:[#allocation2 + $0x30] sm:$0xff]
        %v831 = vld [vmem:[#allocation2 + $0x38] sm:$0xff]
        %v832 = vadd.f32 %v824, %v794
        %v833 = vadd.f32 %v825, %v797
        %v834 = vadd.f32 %v826, %v802
        %v835 = vadd.f32 %v827, %v805
        %v836 = vadd.f32 %v828, %v810
        %v837 = vadd.f32 %v829, %v813
        %v838 = vadd.f32 %v830, %v818
        %v839 = vadd.f32 %v831, %v821
        %840 = vst [vmem:[#allocation2] sm:$0xff] %v832
        %841 = vst [vmem:[#allocation2 + $0x8] sm:$0xff] %v833
        %842 = vst [vmem:[#allocation2 + $0x10] sm:$0xff] %v834
        %843 = vst [vmem:[#allocation2 + $0x18] sm:$0xff] %v835
        %844 = vst [vmem:[#allocation2 + $0x20] sm:$0xff] %v836
        %845 = vst [vmem:[#allocation2 + $0x28] sm:$0xff] %v837
        %846 = vst [vmem:[#allocation2 + $0x30] sm:$0xff] %v838
        %847 = vst [vmem:[#allocation2 + $0x38] sm:$0xff] %v839
        %s848 = sadd.s32 %s184, 18
        %s849 = smul.u32 %s848, 2
        %s850 = smul.addr %s849, 4
        %s851 = scalar_lea.vmem %s177, %s850
        %v852 = vld [vmem:[%s851] sm:$0xf]
        %v853 = vld [vmem:[%s851 + $0x8] sm:$0xf]
        %v854 = vld [vmem:[%s851 + $0x10] sm:$0xf]
        %v855 = vld [vmem:[%s851 + $0x18] sm:$0xf]
        %v856 = vld [vmem:[%s851 + $0x20] sm:$0xf]
        %v857 = vld [vmem:[%s851 + $0x28] sm:$0xf]
        %v858 = vld [vmem:[%s851 + $0x30] sm:$0xf]
        %v859 = vld [vmem:[%s851 + $0x38] sm:$0xf]
        %s860 = scalar_lea.vmem %s181, 192
        %v861 = vld [vmem:[%s860] sm:$0xf]
        %v862 = vld [vmem:[%s860 + $0x4] sm:$0xf]
        %v863 = vld [vmem:[%s860 + $0x8] sm:$0xf]
        %v864 = vld [vmem:[%s860 + $0xc] sm:$0xf]
        %v865 = vld [vmem:[%s860 + $0x10] sm:$0xf]
        %v866 = vld [vmem:[%s860 + $0x14] sm:$0xf]
        %v867 = vld [vmem:[%s860 + $0x18] sm:$0xf]
        %v868 = vld [vmem:[%s860 + $0x1c] sm:$0xf]
        %v869 = vld [vmem:[%s860 + $0x20] sm:$0xf]
        %v870 = vld [vmem:[%s860 + $0x24] sm:$0xf]
        %v871 = vld [vmem:[%s860 + $0x28] sm:$0xf]
        %v872 = vld [vmem:[%s860 + $0x2c] sm:$0xf]
        %v873 = vld [vmem:[%s860 + $0x30] sm:$0xf]
        %v874 = vld [vmem:[%s860 + $0x34] sm:$0xf]
        %v875 = vld [vmem:[%s860 + $0x38] sm:$0xf]
        %v876 = vld [vmem:[%s860 + $0x3c] sm:$0xf]
        %v885 = vunpack.c.l.b16 %v852
        %v886 = vunpack.c.l.b16 %v853
        %v887 = vunpack.c.l.b16 %v854
        %v888 = vunpack.c.l.b16 %v855
        %v889 = vunpack.c.l.b16 %v856
        %v890 = vunpack.c.l.b16 %v857
        %v891 = vunpack.c.l.b16 %v858
        %v892 = vunpack.c.l.b16 %v859
        %v893 = vpack.c.b16 %v886, %v885
        %v894 = vpack.c.b16 %v888, %v887
        %v895 = vpack.c.b16 %v890, %v889
        %v896 = vpack.c.b16 %v892, %v891
        %v917 = vunpack.c.l.b16 %v861
        %v918 = vunpack.c.l.b16 %v862
        %v919 = vunpack.c.l.b16 %v863
        %v920 = vunpack.c.l.b16 %v864
        %v921 = vunpack.c.l.b16 %v865
        %v922 = vunpack.c.l.b16 %v866
        %v923 = vunpack.c.l.b16 %v867
        %v924 = vunpack.c.l.b16 %v868
        %v925 = vunpack.c.l.b16 %v869
        %v926 = vunpack.c.l.b16 %v870
        %v927 = vunpack.c.l.b16 %v871
        %v928 = vunpack.c.l.b16 %v872
        %v929 = vunpack.c.l.b16 %v873
        %v930 = vunpack.c.l.b16 %v874
        %v931 = vunpack.c.l.b16 %v875
        %v932 = vunpack.c.l.b16 %v876
        %v933 = vpack.c.b16 %v918, %v917
        %v934 = vpack.c.b16 %v920, %v919
        %v935 = vpack.c.b16 %v922, %v921
        %v936 = vpack.c.b16 %v924, %v923
        %v937 = vpack.c.b16 %v926, %v925
        %v938 = vpack.c.b16 %v928, %v927
        %v939 = vpack.c.b16 %v930, %v929
        %v940 = vpack.c.b16 %v932, %v931
        %949 = vmatprep.subr.bf16.mxu0 0
        %950 = vmatpush1.bf16.msra.mxu0 %v940
        %951 = vmatprep.subr.bf16.mxu0 0
        %952 = vmatpush1.bf16.msra.mxu0 %v939
        %953 = vmatprep.subr.bf16.mxu0 0
        %954 = vmatpush1.bf16.msra.mxu0 %v938
        %955 = vmatprep.subr.bf16.mxu0 0
        %956 = vmatpush1.bf16.msra.mxu0 %v937
        %957 = vmatprep.subr.bf16.mxu0 0
        %958 = vmatpush1.bf16.msra.mxu0 %v936
        %959 = vmatprep.subr.bf16.mxu0 0
        %960 = vmatpush1.bf16.msra.mxu0 %v935
        %961 = vmatprep.subr.bf16.mxu0 0
        %962 = vmatpush1.bf16.msra.mxu0 %v934
        %963 = vmatprep.subr.bf16.mxu0 0
        %964 = vmatpush1.bf16.msra.mxu0 %v933
        %965 = vmatprep.subr.bf16.mxu0 0
        %966 = vmatpush2.bf16.msra.mxu0 0
        %967 = vmatprep.subr.bf16.mxu0 0
        %968 = vmatpush2.bf16.msra.mxu0 0
        %969 = vmatprep.subr.bf16.mxu0 0
        %970 = vmatpush2.bf16.msra.mxu0 0
        %971 = vmatprep.subr.bf16.mxu0 0
        %972 = vmatpush2.bf16.msra.mxu0 0
        %973 = vmatprep.subr.bf16.mxu0 0
        %974 = vmatpush2.bf16.msra.mxu0 0
        %975 = vmatprep.subr.bf16.mxu0 0
        %976 = vmatpush2.bf16.msra.mxu0 0
        %977 = vmatprep.subr.bf16.mxu0 0
        %978 = vmatpush2.bf16.msra.mxu0 0
        %979 = vmatprep.subr.bf16.mxu0 0
        %980 = vmatpush2.bf16.msra.mxu0 0
        %981 = vmatprep.mubr.bf16.mxu0 0
        %982 = vmatmul.mubr.bf16.gmra.mxu0 %v893
        %v983 = vpop.f32.mrf.mxu0
        %v984 = vadd.f32 0.0, %v983
        %v985 = vpop.f32.mrf.mxu0
        %v986 = vpop.f32.mrf.mxu0
        %v987 = vadd.f32 0.0, %v986
        %v988 = vpop.f32.mrf.mxu0
        %989 = vmatprep.mubr.bf16.mxu0 0
        %990 = vmatmul.mubr.bf16.gmra.mxu0 %v894
        %v991 = vpop.f32.mrf.mxu0
        %v992 = vadd.f32 0.0, %v991
        %v993 = vpop.f32.mrf.mxu0
        %v994 = vpop.f32.mrf.mxu0
        %v995 = vadd.f32 0.0, %v994
        %v996 = vpop.f32.mrf.mxu0
        %997 = vmatprep.mubr.bf16.mxu0 0
        %998 = vmatmul.mubr.bf16.gmra.mxu0 %v895
        %v999 = vpop.f32.mrf.mxu0
        %v1000 = vadd.f32 0.0, %v999
        %v1001 = vpop.f32.mrf.mxu0
        %v1002 = vpop.f32.mrf.mxu0
        %v1003 = vadd.f32 0.0, %v1002
        %v1004 = vpop.f32.mrf.mxu0
        %1005 = vmatprep.mubr.bf16.mxu0 0
        %1006 = vmatmul.mubr.bf16.gmra.mxu0 %v896
        %v1007 = vpop.f32.mrf.mxu0
        %v1008 = vadd.f32 0.0, %v1007
        %v1009 = vpop.f32.mrf.mxu0
        %v1010 = vpop.f32.mrf.mxu0
        %v1011 = vadd.f32 0.0, %v1010
        %v1012 = vpop.f32.mrf.mxu0
        %1013 = vdwg.mxu0
        %v1014 = vld [vmem:[#allocation2] sm:$0xff]
        %v1015 = vld [vmem:[#allocation2 + $0x8] sm:$0xff]
        %v1016 = vld [vmem:[#allocation2 + $0x10] sm:$0xff]
        %v1017 = vld [vmem:[#allocation2 + $0x18] sm:$0xff]
        %v1018 = vld [vmem:[#allocation2 + $0x20] sm:$0xff]
        %v1019 = vld [vmem:[#allocation2 + $0x28] sm:$0xff]
        %v1020 = vld [vmem:[#allocation2 + $0x30] sm:$0xff]
        %v1021 = vld [vmem:[#allocation2 + $0x38] sm:$0xff]
        %v1022 = vadd.f32 %v1014, %v984
        %v1023 = vadd.f32 %v1015, %v987
        %v1024 = vadd.f32 %v1016, %v992
        %v1025 = vadd.f32 %v1017, %v995
        %v1026 = vadd.f32 %v1018, %v1000
        %v1027 = vadd.f32 %v1019, %v1003
        %v1028 = vadd.f32 %v1020, %v1008
        %v1029 = vadd.f32 %v1021, %v1011
        %1030 = vst [vmem:[#allocation2] sm:$0xff] %v1022
        %1031 = vst [vmem:[#allocation2 + $0x8] sm:$0xff] %v1023
        %1032 = vst [vmem:[#allocation2 + $0x10] sm:$0xff] %v1024
        %1033 = vst [vmem:[#allocation2 + $0x18] sm:$0xff] %v1025
        %1034 = vst [vmem:[#allocation2 + $0x20] sm:$0xff] %v1026
        %1035 = vst [vmem:[#allocation2 + $0x28] sm:$0xff] %v1027
        %1036 = vst [vmem:[#allocation2 + $0x30] sm:$0xff] %v1028
        %1037 = vst [vmem:[#allocation2 + $0x38] sm:$0xff] %v1029
        %s1038 = sadd.s32 %s184, 27
        %s1039 = smul.u32 %s1038, 2
        %s1040 = smul.addr %s1039, 4
        %s1041 = scalar_lea.vmem %s177, %s1040
        %v1042 = vld [vmem:[%s1041] sm:$0xf]
        %v1043 = vld [vmem:[%s1041 + $0x8] sm:$0xf]
        %v1044 = vld [vmem:[%s1041 + $0x10] sm:$0xf]
        %v1045 = vld [vmem:[%s1041 + $0x18] sm:$0xf]
        %v1046 = vld [vmem:[%s1041 + $0x20] sm:$0xf]
        %v1047 = vld [vmem:[%s1041 + $0x28] sm:$0xf]
        %v1048 = vld [vmem:[%s1041 + $0x30] sm:$0xf]
        %v1049 = vld [vmem:[%s1041 + $0x38] sm:$0xf]
        %s1050 = scalar_lea.vmem %s181, 256
        %v1051 = vld [vmem:[%s1050] sm:$0xf]
        %v1052 = vld [vmem:[%s1050 + $0x4] sm:$0xf]
        %v1053 = vld [vmem:[%s1050 + $0x8] sm:$0xf]
        %v1054 = vld [vmem:[%s1050 + $0xc] sm:$0xf]
        %v1055 = vld [vmem:[%s1050 + $0x10] sm:$0xf]
        %v1056 = vld [vmem:[%s1050 + $0x14] sm:$0xf]
        %v1057 = vld [vmem:[%s1050 + $0x18] sm:$0xf]
        %v1058 = vld [vmem:[%s1050 + $0x1c] sm:$0xf]
        %v1059 = vld [vmem:[%s1050 + $0x20] sm:$0xf]
        %v1060 = vld [vmem:[%s1050 + $0x24] sm:$0xf]
        %v1061 = vld [vmem:[%s1050 + $0x28] sm:$0xf]
        %v1062 = vld [vmem:[%s1050 + $0x2c] sm:$0xf]
        %v1063 = vld [vmem:[%s1050 + $0x30] sm:$0xf]
        %v1064 = vld [vmem:[%s1050 + $0x34] sm:$0xf]
        %v1065 = vld [vmem:[%s1050 + $0x38] sm:$0xf]
        %v1066 = vld [vmem:[%s1050 + $0x3c] sm:$0xf]
        %v1075 = vunpack.c.l.b16 %v1042
        %v1076 = vunpack.c.l.b16 %v1043
        %v1077 = vunpack.c.l.b16 %v1044
        %v1078 = vunpack.c.l.b16 %v1045
        %v1079 = vunpack.c.l.b16 %v1046
        %v1080 = vunpack.c.l.b16 %v1047
        %v1081 = vunpack.c.l.b16 %v1048
        %v1082 = vunpack.c.l.b16 %v1049
        %v1083 = vpack.c.b16 %v1076, %v1075
        %v1084 = vpack.c.b16 %v1078, %v1077
        %v1085 = vpack.c.b16 %v1080, %v1079
        %v1086 = vpack.c.b16 %v1082, %v1081
        %v1107 = vunpack.c.l.b16 %v1051
        %v1108 = vunpack.c.l.b16 %v1052
        %v1109 = vunpack.c.l.b16 %v1053
        %v1110 = vunpack.c.l.b16 %v1054
        %v1111 = vunpack.c.l.b16 %v1055
        %v1112 = vunpack.c.l.b16 %v1056
        %v1113 = vunpack.c.l.b16 %v1057
        %v1114 = vunpack.c.l.b16 %v1058
        %v1115 = vunpack.c.l.b16 %v1059
        %v1116 = vunpack.c.l.b16 %v1060
        %v1117 = vunpack.c.l.b16 %v1061
        %v1118 = vunpack.c.l.b16 %v1062
        %v1119 = vunpack.c.l.b16 %v1063
        %v1120 = vunpack.c.l.b16 %v1064
        %v1121 = vunpack.c.l.b16 %v1065
        %v1122 = vunpack.c.l.b16 %v1066
        %v1123 = vpack.c.b16 %v1108, %v1107
        %v1124 = vpack.c.b16 %v1110, %v1109
        %v1125 = vpack.c.b16 %v1112, %v1111
        %v1126 = vpack.c.b16 %v1114, %v1113
        %v1127 = vpack.c.b16 %v1116, %v1115
        %v1128 = vpack.c.b16 %v1118, %v1117
        %v1129 = vpack.c.b16 %v1120, %v1119
        %v1130 = vpack.c.b16 %v1122, %v1121
        %1139 = vmatprep.subr.bf16.mxu0 0
        %1140 = vmatpush1.bf16.msra.mxu0 %v1130
        %1141 = vmatprep.subr.bf16.mxu0 0
        %1142 = vmatpush1.bf16.msra.mxu0 %v1129
        %1143 = vmatprep.subr.bf16.mxu0 0
        %1144 = vmatpush1.bf16.msra.mxu0 %v1128
        %1145 = vmatprep.subr.bf16.mxu0 0
        %1146 = vmatpush1.bf16.msra.mxu0 %v1127
        %1147 = vmatprep.subr.bf16.mxu0 0
        %1148 = vmatpush1.bf16.msra.mxu0 %v1126
        %1149 = vmatprep.subr.bf16.mxu0 0
        %1150 = vmatpush1.bf16.msra.mxu0 %v1125
        %1151 = vmatprep.subr.bf16.mxu0 0
        %1152 = vmatpush1.bf16.msra.mxu0 %v1124
        %1153 = vmatprep.subr.bf16.mxu0 0
        %1154 = vmatpush1.bf16.msra.mxu0 %v1123
        %1155 = vmatprep.subr.bf16.mxu0 0
        %1156 = vmatpush2.bf16.msra.mxu0 0
        %1157 = vmatprep.subr.bf16.mxu0 0
        %1158 = vmatpush2.bf16.msra.mxu0 0
        %1159 = vmatprep.subr.bf16.mxu0 0
        %1160 = vmatpush2.bf16.msra.mxu0 0
        %1161 = vmatprep.subr.bf16.mxu0 0
        %1162 = vmatpush2.bf16.msra.mxu0 0
        %1163 = vmatprep.subr.bf16.mxu0 0
        %1164 = vmatpush2.bf16.msra.mxu0 0
        %1165 = vmatprep.subr.bf16.mxu0 0
        %1166 = vmatpush2.bf16.msra.mxu0 0
        %1167 = vmatprep.subr.bf16.mxu0 0
        %1168 = vmatpush2.bf16.msra.mxu0 0
        %1169 = vmatprep.subr.bf16.mxu0 0
        %1170 = vmatpush2.bf16.msra.mxu0 0
        %1171 = vmatprep.mubr.bf16.mxu0 0
        %1172 = vmatmul.mubr.bf16.gmra.mxu0 %v1083
        %v1173 = vpop.f32.mrf.mxu0
        %v1174 = vadd.f32 0.0, %v1173
        %v1175 = vpop.f32.mrf.mxu0
        %v1176 = vpop.f32.mrf.mxu0
        %v1177 = vadd.f32 0.0, %v1176
        %v1178 = vpop.f32.mrf.mxu0
        %1179 = vmatprep.mubr.bf16.mxu0 0
        %1180 = vmatmul.mubr.bf16.gmra.mxu0 %v1084
        %v1181 = vpop.f32.mrf.mxu0
        %v1182 = vadd.f32 0.0, %v1181
        %v1183 = vpop.f32.mrf.mxu0
        %v1184 = vpop.f32.mrf.mxu0
        %v1185 = vadd.f32 0.0, %v1184
        %v1186 = vpop.f32.mrf.mxu0
        %1187 = vmatprep.mubr.bf16.mxu0 0
        %1188 = vmatmul.mubr.bf16.gmra.mxu0 %v1085
        %v1189 = vpop.f32.mrf.mxu0
        %v1190 = vadd.f32 0.0, %v1189
        %v1191 = vpop.f32.mrf.mxu0
        %v1192 = vpop.f32.mrf.mxu0
        %v1193 = vadd.f32 0.0, %v1192
        %v1194 = vpop.f32.mrf.mxu0
        %1195 = vmatprep.mubr.bf16.mxu0 0
        %1196 = vmatmul.mubr.bf16.gmra.mxu0 %v1086
        %v1197 = vpop.f32.mrf.mxu0
        %v1198 = vadd.f32 0.0, %v1197
        %v1199 = vpop.f32.mrf.mxu0
        %v1200 = vpop.f32.mrf.mxu0
        %v1201 = vadd.f32 0.0, %v1200
        %v1202 = vpop.f32.mrf.mxu0
        %1203 = vdwg.mxu0
        %v1204 = vld [vmem:[#allocation2] sm:$0xff]
        %v1205 = vld [vmem:[#allocation2 + $0x8] sm:$0xff]
        %v1206 = vld [vmem:[#allocation2 + $0x10] sm:$0xff]
        %v1207 = vld [vmem:[#allocation2 + $0x18] sm:$0xff]
        %v1208 = vld [vmem:[#allocation2 + $0x20] sm:$0xff]
        %v1209 = vld [vmem:[#allocation2 + $0x28] sm:$0xff]
        %v1210 = vld [vmem:[#allocation2 + $0x30] sm:$0xff]
        %v1211 = vld [vmem:[#allocation2 + $0x38] sm:$0xff]
        %v1212 = vadd.f32 %v1204, %v1174
        %v1213 = vadd.f32 %v1205, %v1177
        %v1214 = vadd.f32 %v1206, %v1182
        %v1215 = vadd.f32 %v1207, %v1185
        %v1216 = vadd.f32 %v1208, %v1190
        %v1217 = vadd.f32 %v1209, %v1193
        %v1218 = vadd.f32 %v1210, %v1198
        %v1219 = vadd.f32 %v1211, %v1201
        %1220 = vst [vmem:[#allocation2] sm:$0xff] %v1212
        %1221 = vst [vmem:[#allocation2 + $0x8] sm:$0xff] %v1213
        %1222 = vst [vmem:[#allocation2 + $0x10] sm:$0xff] %v1214
        %1223 = vst [vmem:[#allocation2 + $0x18] sm:$0xff] %v1215
        %1224 = vst [vmem:[#allocation2 + $0x20] sm:$0xff] %v1216
        %1225 = vst [vmem:[#allocation2 + $0x28] sm:$0xff] %v1217
        %1226 = vst [vmem:[#allocation2 + $0x30] sm:$0xff] %v1218
        %1227 = vst [vmem:[#allocation2 + $0x38] sm:$0xff] %v1219
        %v1228 = vld [vmem:[%s851] sm:$0xf]
        %v1229 = vld [vmem:[%s851 + $0x4] sm:$0x1]
        %v1230 = vld [vmem:[%s851 + $0x8] sm:$0xf]
        %v1231 = vld [vmem:[%s851 + $0xc] sm:$0x1]
        %v1232 = vld [vmem:[%s851 + $0x10] sm:$0xf]
        %v1233 = vld [vmem:[%s851 + $0x14] sm:$0x1]
        %v1234 = vld [vmem:[%s851 + $0x18] sm:$0xf]
        %v1235 = vld [vmem:[%s851 + $0x1c] sm:$0x1]
        %v1236 = vld [vmem:[%s851 + $0x20] sm:$0xf]
        %v1237 = vld [vmem:[%s851 + $0x24] sm:$0x1]
        %v1238 = vld [vmem:[%s851 + $0x28] sm:$0xf]
        %v1239 = vld [vmem:[%s851 + $0x2c] sm:$0x1]
        %v1240 = vld [vmem:[%s851 + $0x30] sm:$0xf]
        %v1241 = vld [vmem:[%s851 + $0x34] sm:$0x1]
        %v1242 = vld [vmem:[%s851 + $0x38] sm:$0xf]
        %v1243 = vld [vmem:[%s851 + $0x3c] sm:$0x1]
        %v1245 = vshrl.u32 %v1228, 16
        %v1247 = vrot.slane %v1245, 4
        %v1248 = vshll.u32 %v1228, 16
        %v1250 = vrot.slane %v1248, 5
        %v1251 = vor.u32 %v1247, %v1250
        %v1252 = vrot.slane %v1251, 4
        %v1254 = vshll.u32 %v1229, 16
        %v1256 = vrot.slane %v1254, 5
        %v1257 = vsel %vm565, %v1252, %v1256
        %v1259 = vshrl.u32 %v1230, 16
        %v1261 = vrot.slane %v1259, 4
        %v1262 = vshll.u32 %v1230, 16
        %v1264 = vrot.slane %v1262, 5
        %v1265 = vor.u32 %v1261, %v1264
        %v1266 = vrot.slane %v1265, 4
        %v1268 = vshll.u32 %v1231, 16
        %v1270 = vrot.slane %v1268, 5
        %v1271 = vsel %vm565, %v1266, %v1270
        %v1273 = vshrl.u32 %v1232, 16
        %v1275 = vrot.slane %v1273, 4
        %v1276 = vshll.u32 %v1232, 16
        %v1278 = vrot.slane %v1276, 5
        %v1279 = vor.u32 %v1275, %v1278
        %v1280 = vrot.slane %v1279, 4
        %v1282 = vshll.u32 %v1233, 16
        %v1284 = vrot.slane %v1282, 5
        %v1285 = vsel %vm565, %v1280, %v1284
        %v1287 = vshrl.u32 %v1234, 16
        %v1289 = vrot.slane %v1287, 4
        %v1290 = vshll.u32 %v1234, 16
        %v1292 = vrot.slane %v1290, 5
        %v1293 = vor.u32 %v1289, %v1292
        %v1294 = vrot.slane %v1293, 4
        %v1296 = vshll.u32 %v1235, 16
        %v1298 = vrot.slane %v1296, 5
        %v1299 = vsel %vm565, %v1294, %v1298
        %v1301 = vshrl.u32 %v1236, 16
        %v1303 = vrot.slane %v1301, 4
        %v1304 = vshll.u32 %v1236, 16
        %v1306 = vrot.slane %v1304, 5
        %v1307 = vor.u32 %v1303, %v1306
        %v1308 = vrot.slane %v1307, 4
        %v1310 = vshll.u32 %v1237, 16
        %v1312 = vrot.slane %v1310, 5
        %v1313 = vsel %vm565, %v1308, %v1312
        %v1315 = vshrl.u32 %v1238, 16
        %v1317 = vrot.slane %v1315, 4
        %v1318 = vshll.u32 %v1238, 16
        %v1320 = vrot.slane %v1318, 5
        %v1321 = vor.u32 %v1317, %v1320
        %v1322 = vrot.slane %v1321, 4
        %v1324 = vshll.u32 %v1239, 16
        %v1326 = vrot.slane %v1324, 5
        %v1327 = vsel %vm565, %v1322, %v1326
        %v1329 = vshrl.u32 %v1240, 16
        %v1331 = vrot.slane %v1329, 4
        %v1332 = vshll.u32 %v1240, 16
        %v1334 = vrot.slane %v1332, 5
        %v1335 = vor.u32 %v1331, %v1334
        %v1336 = vrot.slane %v1335, 4
        %v1338 = vshll.u32 %v1241, 16
        %v1340 = vrot.slane %v1338, 5
        %v1341 = vsel %vm565, %v1336, %v1340
        %v1343 = vshrl.u32 %v1242, 16
        %v1345 = vrot.slane %v1343, 4
        %v1346 = vshll.u32 %v1242, 16
        %v1348 = vrot.slane %v1346, 5
        %v1349 = vor.u32 %v1345, %v1348
        %v1350 = vrot.slane %v1349, 4
        %v1352 = vshll.u32 %v1243, 16
        %v1354 = vrot.slane %v1352, 5
        %v1355 = vsel %vm565, %v1350, %v1354
        %s1356 = scalar_lea.vmem %s181, 320
        %v1357 = vld [vmem:[%s1356] sm:$0xf]
        %v1358 = vld [vmem:[%s1356 + $0x4] sm:$0xf]
        %v1359 = vld [vmem:[%s1356 + $0x8] sm:$0xf]
        %v1360 = vld [vmem:[%s1356 + $0xc] sm:$0xf]
        %v1361 = vld [vmem:[%s1356 + $0x10] sm:$0xf]
        %v1362 = vld [vmem:[%s1356 + $0x14] sm:$0xf]
        %v1363 = vld [vmem:[%s1356 + $0x18] sm:$0xf]
        %v1364 = vld [vmem:[%s1356 + $0x1c] sm:$0xf]
        %v1365 = vld [vmem:[%s1356 + $0x20] sm:$0xf]
        %v1366 = vld [vmem:[%s1356 + $0x24] sm:$0xf]
        %v1367 = vld [vmem:[%s1356 + $0x28] sm:$0xf]
        %v1368 = vld [vmem:[%s1356 + $0x2c] sm:$0xf]
        %v1369 = vld [vmem:[%s1356 + $0x30] sm:$0xf]
        %v1370 = vld [vmem:[%s1356 + $0x34] sm:$0xf]
        %v1371 = vld [vmem:[%s1356 + $0x38] sm:$0xf]
        %v1372 = vld [vmem:[%s1356 + $0x3c] sm:$0xf]
        %v1373 = vunpack.c.l.b16 %v1257
        %v1374 = vunpack.c.l.b16 %v1271
        %v1375 = vunpack.c.l.b16 %v1285
        %v1376 = vunpack.c.l.b16 %v1299
        %v1377 = vunpack.c.l.b16 %v1313
        %v1378 = vunpack.c.l.b16 %v1327
        %v1379 = vunpack.c.l.b16 %v1341
        %v1380 = vunpack.c.l.b16 %v1355
        %v1381 = vpack.c.b16 %v1374, %v1373
        %v1382 = vpack.c.b16 %v1376, %v1375
        %v1383 = vpack.c.b16 %v1378, %v1377
        %v1384 = vpack.c.b16 %v1380, %v1379
        %v1405 = vunpack.c.l.b16 %v1357
        %v1406 = vunpack.c.l.b16 %v1358
        %v1407 = vunpack.c.l.b16 %v1359
        %v1408 = vunpack.c.l.b16 %v1360
        %v1409 = vunpack.c.l.b16 %v1361
        %v1410 = vunpack.c.l.b16 %v1362
        %v1411 = vunpack.c.l.b16 %v1363
        %v1412 = vunpack.c.l.b16 %v1364
        %v1413 = vunpack.c.l.b16 %v1365
        %v1414 = vunpack.c.l.b16 %v1366
        %v1415 = vunpack.c.l.b16 %v1367
        %v1416 = vunpack.c.l.b16 %v1368
        %v1417 = vunpack.c.l.b16 %v1369
        %v1418 = vunpack.c.l.b16 %v1370
        %v1419 = vunpack.c.l.b16 %v1371
        %v1420 = vunpack.c.l.b16 %v1372
        %v1421 = vpack.c.b16 %v1406, %v1405
        %v1422 = vpack.c.b16 %v1408, %v1407
        %v1423 = vpack.c.b16 %v1410, %v1409
        %v1424 = vpack.c.b16 %v1412, %v1411
        %v1425 = vpack.c.b16 %v1414, %v1413
        %v1426 = vpack.c.b16 %v1416, %v1415
        %v1427 = vpack.c.b16 %v1418, %v1417
        %v1428 = vpack.c.b16 %v1420, %v1419
        %1437 = vmatprep.subr.bf16.mxu0 0
        %1438 = vmatpush1.bf16.msra.mxu0 %v1428
        %1439 = vmatprep.subr.bf16.mxu0 0
        %1440 = vmatpush1.bf16.msra.mxu0 %v1427
        %1441 = vmatprep.subr.bf16.mxu0 0
        %1442 = vmatpush1.bf16.msra.mxu0 %v1426
        %1443 = vmatprep.subr.bf16.mxu0 0
        %1444 = vmatpush1.bf16.msra.mxu0 %v1425
        %1445 = vmatprep.subr.bf16.mxu0 0
        %1446 = vmatpush1.bf16.msra.mxu0 %v1424
        %1447 = vmatprep.subr.bf16.mxu0 0
        %1448 = vmatpush1.bf16.msra.mxu0 %v1423
        %1449 = vmatprep.subr.bf16.mxu0 0
        %1450 = vmatpush1.bf16.msra.mxu0 %v1422
        %1451 = vmatprep.subr.bf16.mxu0 0
        %1452 = vmatpush1.bf16.msra.mxu0 %v1421
        %1453 = vmatprep.subr.bf16.mxu0 0
        %1454 = vmatpush2.bf16.msra.mxu0 0
        %1455 = vmatprep.subr.bf16.mxu0 0
        %1456 = vmatpush2.bf16.msra.mxu0 0
        %1457 = vmatprep.subr.bf16.mxu0 0
        %1458 = vmatpush2.bf16.msra.mxu0 0
        %1459 = vmatprep.subr.bf16.mxu0 0
        %1460 = vmatpush2.bf16.msra.mxu0 0
        %1461 = vmatprep.subr.bf16.mxu0 0
        %1462 = vmatpush2.bf16.msra.mxu0 0
        %1463 = vmatprep.subr.bf16.mxu0 0
        %1464 = vmatpush2.bf16.msra.mxu0 0
        %1465 = vmatprep.subr.bf16.mxu0 0
        %1466 = vmatpush2.bf16.msra.mxu0 0
        %1467 = vmatprep.subr.bf16.mxu0 0
        %1468 = vmatpush2.bf16.msra.mxu0 0
        %1469 = vmatprep.mubr.bf16.mxu0 0
        %1470 = vmatmul.mubr.bf16.gmra.mxu0 %v1381
        %v1471 = vpop.f32.mrf.mxu0
        %v1472 = vadd.f32 0.0, %v1471
        %v1473 = vpop.f32.mrf.mxu0
        %v1474 = vpop.f32.mrf.mxu0
        %v1475 = vadd.f32 0.0, %v1474
        %v1476 = vpop.f32.mrf.mxu0
        %1477 = vmatprep.mubr.bf16.mxu0 0
        %1478 = vmatmul.mubr.bf16.gmra.mxu0 %v1382
        %v1479 = vpop.f32.mrf.mxu0
        %v1480 = vadd.f32 0.0, %v1479
        %v1481 = vpop.f32.mrf.mxu0
        %v1482 = vpop.f32.mrf.mxu0
        %v1483 = vadd.f32 0.0, %v1482
        %v1484 = vpop.f32.mrf.mxu0
        %1485 = vmatprep.mubr.bf16.mxu0 0
        %1486 = vmatmul.mubr.bf16.gmra.mxu0 %v1383
        %v1487 = vpop.f32.mrf.mxu0
        %v1488 = vadd.f32 0.0, %v1487
        %v1489 = vpop.f32.mrf.mxu0
        %v1490 = vpop.f32.mrf.mxu0
        %v1491 = vadd.f32 0.0, %v1490
        %v1492 = vpop.f32.mrf.mxu0
        %1493 = vmatprep.mubr.bf16.mxu0 0
        %1494 = vmatmul.mubr.bf16.gmra.mxu0 %v1384
        %v1495 = vpop.f32.mrf.mxu0
        %v1496 = vadd.f32 0.0, %v1495
        %v1497 = vpop.f32.mrf.mxu0
        %v1498 = vpop.f32.mrf.mxu0
        %v1499 = vadd.f32 0.0, %v1498
        %v1500 = vpop.f32.mrf.mxu0
        %1501 = vdwg.mxu0
        %v1502 = vld [vmem:[#allocation2] sm:$0xff]
        %v1503 = vld [vmem:[#allocation2 + $0x8] sm:$0xff]
        %v1504 = vld [vmem:[#allocation2 + $0x10] sm:$0xff]
        %v1505 = vld [vmem:[#allocation2 + $0x18] sm:$0xff]
        %v1506 = vld [vmem:[#allocation2 + $0x20] sm:$0xff]
        %v1507 = vld [vmem:[#allocation2 + $0x28] sm:$0xff]
        %v1508 = vld [vmem:[#allocation2 + $0x30] sm:$0xff]
        %v1509 = vld [vmem:[#allocation2 + $0x38] sm:$0xff]
        %v1510 = vadd.f32 %v1502, %v1472
        %v1511 = vadd.f32 %v1503, %v1475
        %v1512 = vadd.f32 %v1504, %v1480
        %v1513 = vadd.f32 %v1505, %v1483
        %v1514 = vadd.f32 %v1506, %v1488
        %v1515 = vadd.f32 %v1507, %v1491
        %v1516 = vadd.f32 %v1508, %v1496
        %v1517 = vadd.f32 %v1509, %v1499
        %1518 = vst [vmem:[#allocation2] sm:$0xff] %v1510
        %1519 = vst [vmem:[#allocation2 + $0x8] sm:$0xff] %v1511
        %1520 = vst [vmem:[#allocation2 + $0x10] sm:$0xff] %v1512
        %1521 = vst [vmem:[#allocation2 + $0x18] sm:$0xff] %v1513
        %1522 = vst [vmem:[#allocation2 + $0x20] sm:$0xff] %v1514
        %1523 = vst [vmem:[#allocation2 + $0x28] sm:$0xff] %v1515
        %1524 = vst [vmem:[#allocation2 + $0x30] sm:$0xff] %v1516
        %1525 = vst [vmem:[#allocation2 + $0x38] sm:$0xff] %v1517
        %s1526 = sadd.s32 %s184, 1
        %s1527 = smul.u32 %s1526, 2
        %s1528 = smul.addr %s1527, 4
        %s1529 = scalar_lea.vmem %s177, %s1528
        %v1530 = vld [vmem:[%s1529] sm:$0xf]
        %v1531 = vld [vmem:[%s1529 + $0x8] sm:$0xf]
        %v1532 = vld [vmem:[%s1529 + $0x10] sm:$0xf]
        %v1533 = vld [vmem:[%s1529 + $0x18] sm:$0xf]
        %v1534 = vld [vmem:[%s1529 + $0x20] sm:$0xf]
        %v1535 = vld [vmem:[%s1529 + $0x28] sm:$0xf]
        %v1536 = vld [vmem:[%s1529 + $0x30] sm:$0xf]
        %v1537 = vld [vmem:[%s1529 + $0x38] sm:$0xf]
        %s1538 = scalar_lea.vmem %s181, 384
        %v1539 = vld [vmem:[%s1538] sm:$0xf]
        %v1540 = vld [vmem:[%s1538 + $0x4] sm:$0xf]
        %v1541 = vld [vmem:[%s1538 + $0x8] sm:$0xf]
        %v1542 = vld [vmem:[%s1538 + $0xc] sm:$0xf]
        %v1543 = vld [vmem:[%s1538 + $0x10] sm:$0xf]
        %v1544 = vld [vmem:[%s1538 + $0x14] sm:$0xf]
        %v1545 = vld [vmem:[%s1538 + $0x18] sm:$0xf]
        %v1546 = vld [vmem:[%s1538 + $0x1c] sm:$0xf]
        %v1547 = vld [vmem:[%s1538 + $0x20] sm:$0xf]
        %v1548 = vld [vmem:[%s1538 + $0x24] sm:$0xf]
        %v1549 = vld [vmem:[%s1538 + $0x28] sm:$0xf]
        %v1550 = vld [vmem:[%s1538 + $0x2c] sm:$0xf]
        %v1551 = vld [vmem:[%s1538 + $0x30] sm:$0xf]
        %v1552 = vld [vmem:[%s1538 + $0x34] sm:$0xf]
        %v1553 = vld [vmem:[%s1538 + $0x38] sm:$0xf]
        %v1554 = vld [vmem:[%s1538 + $0x3c] sm:$0xf]
        %v1563 = vunpack.c.l.b16 %v1530
        %v1564 = vunpack.c.l.b16 %v1531
        %v1565 = vunpack.c.l.b16 %v1532
        %v1566 = vunpack.c.l.b16 %v1533
        %v1567 = vunpack.c.l.b16 %v1534
        %v1568 = vunpack.c.l.b16 %v1535
        %v1569 = vunpack.c.l.b16 %v1536
        %v1570 = vunpack.c.l.b16 %v1537
        %v1571 = vpack.c.b16 %v1564, %v1563
        %v1572 = vpack.c.b16 %v1566, %v1565
        %v1573 = vpack.c.b16 %v1568, %v1567
        %v1574 = vpack.c.b16 %v1570, %v1569
        %v1595 = vunpack.c.l.b16 %v1539
        %v1596 = vunpack.c.l.b16 %v1540
        %v1597 = vunpack.c.l.b16 %v1541
        %v1598 = vunpack.c.l.b16 %v1542
        %v1599 = vunpack.c.l.b16 %v1543
        %v1600 = vunpack.c.l.b16 %v1544
        %v1601 = vunpack.c.l.b16 %v1545
        %v1602 = vunpack.c.l.b16 %v1546
        %v1603 = vunpack.c.l.b16 %v1547
        %v1604 = vunpack.c.l.b16 %v1548
        %v1605 = vunpack.c.l.b16 %v1549
        %v1606 = vunpack.c.l.b16 %v1550
        %v1607 = vunpack.c.l.b16 %v1551
        %v1608 = vunpack.c.l.b16 %v1552
        %v1609 = vunpack.c.l.b16 %v1553
        %v1610 = vunpack.c.l.b16 %v1554
        %v1611 = vpack.c.b16 %v1596, %v1595
        %v1612 = vpack.c.b16 %v1598, %v1597
        %v1613 = vpack.c.b16 %v1600, %v1599
        %v1614 = vpack.c.b16 %v1602, %v1601
        %v1615 = vpack.c.b16 %v1604, %v1603
        %v1616 = vpack.c.b16 %v1606, %v1605
        %v1617 = vpack.c.b16 %v1608, %v1607
        %v1618 = vpack.c.b16 %v1610, %v1609
        %1627 = vmatprep.subr.bf16.mxu0 0
        %1628 = vmatpush1.bf16.msra.mxu0 %v1618
        %1629 = vmatprep.subr.bf16.mxu0 0
        %1630 = vmatpush1.bf16.msra.mxu0 %v1617
        %1631 = vmatprep.subr.bf16.mxu0 0
        %1632 = vmatpush1.bf16.msra.mxu0 %v1616
        %1633 = vmatprep.subr.bf16.mxu0 0
        %1634 = vmatpush1.bf16.msra.mxu0 %v1615
        %1635 = vmatprep.subr.bf16.mxu0 0
        %1636 = vmatpush1.bf16.msra.mxu0 %v1614
        %1637 = vmatprep.subr.bf16.mxu0 0
        %1638 = vmatpush1.bf16.msra.mxu0 %v1613
        %1639 = vmatprep.subr.bf16.mxu0 0
        %1640 = vmatpush1.bf16.msra.mxu0 %v1612
        %1641 = vmatprep.subr.bf16.mxu0 0
        %1642 = vmatpush1.bf16.msra.mxu0 %v1611
        %1643 = vmatprep.subr.bf16.mxu0 0
        %1644 = vmatpush2.bf16.msra.mxu0 0
        %1645 = vmatprep.subr.bf16.mxu0 0
        %1646 = vmatpush2.bf16.msra.mxu0 0
        %1647 = vmatprep.subr.bf16.mxu0 0
        %1648 = vmatpush2.bf16.msra.mxu0 0
        %1649 = vmatprep.subr.bf16.mxu0 0
        %1650 = vmatpush2.bf16.msra.mxu0 0
        %1651 = vmatprep.subr.bf16.mxu0 0
        %1652 = vmatpush2.bf16.msra.mxu0 0
        %1653 = vmatprep.subr.bf16.mxu0 0
        %1654 = vmatpush2.bf16.msra.mxu0 0
        %1655 = vmatprep.subr.bf16.mxu0 0
        %1656 = vmatpush2.bf16.msra.mxu0 0
        %1657 = vmatprep.subr.bf16.mxu0 0
        %1658 = vmatpush2.bf16.msra.mxu0 0
        %1659 = vmatprep.mubr.bf16.mxu0 0
        %1660 = vmatmul.mubr.bf16.gmra.mxu0 %v1571
        %v1661 = vpop.f32.mrf.mxu0
        %v1662 = vadd.f32 0.0, %v1661
        %v1663 = vpop.f32.mrf.mxu0
        %v1664 = vpop.f32.mrf.mxu0
        %v1665 = vadd.f32 0.0, %v1664
        %v1666 = vpop.f32.mrf.mxu0
        %1667 = vmatprep.mubr.bf16.mxu0 0
        %1668 = vmatmul.mubr.bf16.gmra.mxu0 %v1572
        %v1669 = vpop.f32.mrf.mxu0
        %v1670 = vadd.f32 0.0, %v1669
        %v1671 = vpop.f32.mrf.mxu0
        %v1672 = vpop.f32.mrf.mxu0
        %v1673 = vadd.f32 0.0, %v1672
        %v1674 = vpop.f32.mrf.mxu0
        %1675 = vmatprep.mubr.bf16.mxu0 0
        %1676 = vmatmul.mubr.bf16.gmra.mxu0 %v1573
        %v1677 = vpop.f32.mrf.mxu0
        %v1678 = vadd.f32 0.0, %v1677
        %v1679 = vpop.f32.mrf.mxu0
        %v1680 = vpop.f32.mrf.mxu0
        %v1681 = vadd.f32 0.0, %v1680
        %v1682 = vpop.f32.mrf.mxu0
        %1683 = vmatprep.mubr.bf16.mxu0 0
        %1684 = vmatmul.mubr.bf16.gmra.mxu0 %v1574
        %v1685 = vpop.f32.mrf.mxu0
        %v1686 = vadd.f32 0.0, %v1685
        %v1687 = vpop.f32.mrf.mxu0
        %v1688 = vpop.f32.mrf.mxu0
        %v1689 = vadd.f32 0.0, %v1688
        %v1690 = vpop.f32.mrf.mxu0
        %1691 = vdwg.mxu0
        %v1692 = vld [vmem:[#allocation2] sm:$0xff]
        %v1693 = vld [vmem:[#allocation2 + $0x8] sm:$0xff]
        %v1694 = vld [vmem:[#allocation2 + $0x10] sm:$0xff]
        %v1695 = vld [vmem:[#allocation2 + $0x18] sm:$0xff]
        %v1696 = vld [vmem:[#allocation2 + $0x20] sm:$0xff]
        %v1697 = vld [vmem:[#allocation2 + $0x28] sm:$0xff]
        %v1698 = vld [vmem:[#allocation2 + $0x30] sm:$0xff]
        %v1699 = vld [vmem:[#allocation2 + $0x38] sm:$0xff]
        %v1700 = vadd.f32 %v1692, %v1662
        %v1701 = vadd.f32 %v1693, %v1665
        %v1702 = vadd.f32 %v1694, %v1670
        %v1703 = vadd.f32 %v1695, %v1673
        %v1704 = vadd.f32 %v1696, %v1678
        %v1705 = vadd.f32 %v1697, %v1681
        %v1706 = vadd.f32 %v1698, %v1686
        %v1707 = vadd.f32 %v1699, %v1689
        %1708 = vst [vmem:[#allocation2] sm:$0xff] %v1700
        %1709 = vst [vmem:[#allocation2 + $0x8] sm:$0xff] %v1701
        %1710 = vst [vmem:[#allocation2 + $0x10] sm:$0xff] %v1702
        %1711 = vst [vmem:[#allocation2 + $0x18] sm:$0xff] %v1703
        %1712 = vst [vmem:[#allocation2 + $0x20] sm:$0xff] %v1704
        %1713 = vst [vmem:[#allocation2 + $0x28] sm:$0xff] %v1705
        %1714 = vst [vmem:[#allocation2 + $0x30] sm:$0xff] %v1706
        %1715 = vst [vmem:[#allocation2 + $0x38] sm:$0xff] %v1707
        %s1716 = sadd.s32 %s184, 10
        %s1717 = smul.u32 %s1716, 2
        %s1718 = smul.addr %s1717, 4
        %s1719 = scalar_lea.vmem %s177, %s1718
        %v1720 = vld [vmem:[%s1719] sm:$0xf]
        %v1721 = vld [vmem:[%s1719 + $0x8] sm:$0xf]
        %v1722 = vld [vmem:[%s1719 + $0x10] sm:$0xf]
        %v1723 = vld [vmem:[%s1719 + $0x18] sm:$0xf]
        %v1724 = vld [vmem:[%s1719 + $0x20] sm:$0xf]
        %v1725 = vld [vmem:[%s1719 + $0x28] sm:$0xf]
        %v1726 = vld [vmem:[%s1719 + $0x30] sm:$0xf]
        %v1727 = vld [vmem:[%s1719 + $0x38] sm:$0xf]
        %s1728 = scalar_lea.vmem %s181, 448
        %v1729 = vld [vmem:[%s1728] sm:$0xf]
        %v1730 = vld [vmem:[%s1728 + $0x4] sm:$0xf]
        %v1731 = vld [vmem:[%s1728 + $0x8] sm:$0xf]
        %v1732 = vld [vmem:[%s1728 + $0xc] sm:$0xf]
        %v1733 = vld [vmem:[%s1728 + $0x10] sm:$0xf]
        %v1734 = vld [vmem:[%s1728 + $0x14] sm:$0xf]
        %v1735 = vld [vmem:[%s1728 + $0x18] sm:$0xf]
        %v1736 = vld [vmem:[%s1728 + $0x1c] sm:$0xf]
        %v1737 = vld [vmem:[%s1728 + $0x20] sm:$0xf]
        %v1738 = vld [vmem:[%s1728 + $0x24] sm:$0xf]
        %v1739 = vld [vmem:[%s1728 + $0x28] sm:$0xf]
        %v1740 = vld [vmem:[%s1728 + $0x2c] sm:$0xf]
        %v1741 = vld [vmem:[%s1728 + $0x30] sm:$0xf]
        %v1742 = vld [vmem:[%s1728 + $0x34] sm:$0xf]
        %v1743 = vld [vmem:[%s1728 + $0x38] sm:$0xf]
        %v1744 = vld [vmem:[%s1728 + $0x3c] sm:$0xf]
        %v1753 = vunpack.c.l.b16 %v1720
        %v1754 = vunpack.c.l.b16 %v1721
        %v1755 = vunpack.c.l.b16 %v1722
        %v1756 = vunpack.c.l.b16 %v1723
        %v1757 = vunpack.c.l.b16 %v1724
        %v1758 = vunpack.c.l.b16 %v1725
        %v1759 = vunpack.c.l.b16 %v1726
        %v1760 = vunpack.c.l.b16 %v1727
        %v1761 = vpack.c.b16 %v1754, %v1753
        %v1762 = vpack.c.b16 %v1756, %v1755
        %v1763 = vpack.c.b16 %v1758, %v1757
        %v1764 = vpack.c.b16 %v1760, %v1759
        %v1785 = vunpack.c.l.b16 %v1729
        %v1786 = vunpack.c.l.b16 %v1730
        %v1787 = vunpack.c.l.b16 %v1731
        %v1788 = vunpack.c.l.b16 %v1732
        %v1789 = vunpack.c.l.b16 %v1733
        %v1790 = vunpack.c.l.b16 %v1734
        %v1791 = vunpack.c.l.b16 %v1735
        %v1792 = vunpack.c.l.b16 %v1736
        %v1793 = vunpack.c.l.b16 %v1737
        %v1794 = vunpack.c.l.b16 %v1738
        %v1795 = vunpack.c.l.b16 %v1739
        %v1796 = vunpack.c.l.b16 %v1740
        %v1797 = vunpack.c.l.b16 %v1741
        %v1798 = vunpack.c.l.b16 %v1742
        %v1799 = vunpack.c.l.b16 %v1743
        %v1800 = vunpack.c.l.b16 %v1744
        %v1801 = vpack.c.b16 %v1786, %v1785
        %v1802 = vpack.c.b16 %v1788, %v1787
        %v1803 = vpack.c.b16 %v1790, %v1789
        %v1804 = vpack.c.b16 %v1792, %v1791
        %v1805 = vpack.c.b16 %v1794, %v1793
        %v1806 = vpack.c.b16 %v1796, %v1795
        %v1807 = vpack.c.b16 %v1798, %v1797
        %v1808 = vpack.c.b16 %v1800, %v1799
        %1817 = vmatprep.subr.bf16.mxu0 0
        %1818 = vmatpush1.bf16.msra.mxu0 %v1808
        %1819 = vmatprep.subr.bf16.mxu0 0
        %1820 = vmatpush1.bf16.msra.mxu0 %v1807
        %1821 = vmatprep.subr.bf16.mxu0 0
        %1822 = vmatpush1.bf16.msra.mxu0 %v1806
        %1823 = vmatprep.subr.bf16.mxu0 0
        %1824 = vmatpush1.bf16.msra.mxu0 %v1805
        %1825 = vmatprep.subr.bf16.mxu0 0
        %1826 = vmatpush1.bf16.msra.mxu0 %v1804
        %1827 = vmatprep.subr.bf16.mxu0 0
        %1828 = vmatpush1.bf16.msra.mxu0 %v1803
        %1829 = vmatprep.subr.bf16.mxu0 0
        %1830 = vmatpush1.bf16.msra.mxu0 %v1802
        %1831 = vmatprep.subr.bf16.mxu0 0
        %1832 = vmatpush1.bf16.msra.mxu0 %v1801
        %1833 = vmatprep.subr.bf16.mxu0 0
        %1834 = vmatpush2.bf16.msra.mxu0 0
        %1835 = vmatprep.subr.bf16.mxu0 0
        %1836 = vmatpush2.bf16.msra.mxu0 0
        %1837 = vmatprep.subr.bf16.mxu0 0
        %1838 = vmatpush2.bf16.msra.mxu0 0
        %1839 = vmatprep.subr.bf16.mxu0 0
        %1840 = vmatpush2.bf16.msra.mxu0 0
        %1841 = vmatprep.subr.bf16.mxu0 0
        %1842 = vmatpush2.bf16.msra.mxu0 0
        %1843 = vmatprep.subr.bf16.mxu0 0
        %1844 = vmatpush2.bf16.msra.mxu0 0
        %1845 = vmatprep.subr.bf16.mxu0 0
        %1846 = vmatpush2.bf16.msra.mxu0 0
        %1847 = vmatprep.subr.bf16.mxu0 0
        %1848 = vmatpush2.bf16.msra.mxu0 0
        %1849 = vmatprep.mubr.bf16.mxu0 0
        %1850 = vmatmul.mubr.bf16.gmra.mxu0 %v1761
        %v1851 = vpop.f32.mrf.mxu0
        %v1852 = vadd.f32 0.0, %v1851
        %v1853 = vpop.f32.mrf.mxu0
        %v1854 = vpop.f32.mrf.mxu0
        %v1855 = vadd.f32 0.0, %v1854
        %v1856 = vpop.f32.mrf.mxu0
        %1857 = vmatprep.mubr.bf16.mxu0 0
        %1858 = vmatmul.mubr.bf16.gmra.mxu0 %v1762
        %v1859 = vpop.f32.mrf.mxu0
        %v1860 = vadd.f32 0.0, %v1859
        %v1861 = vpop.f32.mrf.mxu0
        %v1862 = vpop.f32.mrf.mxu0
        %v1863 = vadd.f32 0.0, %v1862
        %v1864 = vpop.f32.mrf.mxu0
        %1865 = vmatprep.mubr.bf16.mxu0 0
        %1866 = vmatmul.mubr.bf16.gmra.mxu0 %v1763
        %v1867 = vpop.f32.mrf.mxu0
        %v1868 = vadd.f32 0.0, %v1867
        %v1869 = vpop.f32.mrf.mxu0
        %v1870 = vpop.f32.mrf.mxu0
        %v1871 = vadd.f32 0.0, %v1870
        %v1872 = vpop.f32.mrf.mxu0
        %1873 = vmatprep.mubr.bf16.mxu0 0
        %1874 = vmatmul.mubr.bf16.gmra.mxu0 %v1764
        %v1875 = vpop.f32.mrf.mxu0
        %v1876 = vadd.f32 0.0, %v1875
        %v1877 = vpop.f32.mrf.mxu0
        %v1878 = vpop.f32.mrf.mxu0
        %v1879 = vadd.f32 0.0, %v1878
        %v1880 = vpop.f32.mrf.mxu0
        %1881 = vdwg.mxu0
        %v1882 = vld [vmem:[#allocation2] sm:$0xff]
        %v1883 = vld [vmem:[#allocation2 + $0x8] sm:$0xff]
        %v1884 = vld [vmem:[#allocation2 + $0x10] sm:$0xff]
        %v1885 = vld [vmem:[#allocation2 + $0x18] sm:$0xff]
        %v1886 = vld [vmem:[#allocation2 + $0x20] sm:$0xff]
        %v1887 = vld [vmem:[#allocation2 + $0x28] sm:$0xff]
        %v1888 = vld [vmem:[#allocation2 + $0x30] sm:$0xff]
        %v1889 = vld [vmem:[#allocation2 + $0x38] sm:$0xff]
        %v1890 = vadd.f32 %v1882, %v1852
        %v1891 = vadd.f32 %v1883, %v1855
        %v1892 = vadd.f32 %v1884, %v1860
        %v1893 = vadd.f32 %v1885, %v1863
        %v1894 = vadd.f32 %v1886, %v1868
        %v1895 = vadd.f32 %v1887, %v1871
        %v1896 = vadd.f32 %v1888, %v1876
        %v1897 = vadd.f32 %v1889, %v1879
        %1898 = vst [vmem:[#allocation2] sm:$0xff] %v1890
        %1899 = vst [vmem:[#allocation2 + $0x8] sm:$0xff] %v1891
        %1900 = vst [vmem:[#allocation2 + $0x10] sm:$0xff] %v1892
        %1901 = vst [vmem:[#allocation2 + $0x18] sm:$0xff] %v1893
        %1902 = vst [vmem:[#allocation2 + $0x20] sm:$0xff] %v1894
        %1903 = vst [vmem:[#allocation2 + $0x28] sm:$0xff] %v1895
        %1904 = vst [vmem:[#allocation2 + $0x30] sm:$0xff] %v1896
        %1905 = vst [vmem:[#allocation2 + $0x38] sm:$0xff] %v1897
        %v1906 = vld [vmem:[%s1529] sm:$0xf]
        %v1907 = vld [vmem:[%s1529 + $0x4] sm:$0x1]
        %v1908 = vld [vmem:[%s1529 + $0x8] sm:$0xf]
        %v1909 = vld [vmem:[%s1529 + $0xc] sm:$0x1]
        %v1910 = vld [vmem:[%s1529 + $0x10] sm:$0xf]
        %v1911 = vld [vmem:[%s1529 + $0x14] sm:$0x1]
        %v1912 = vld [vmem:[%s1529 + $0x18] sm:$0xf]
        %v1913 = vld [vmem:[%s1529 + $0x1c] sm:$0x1]
        %v1914 = vld [vmem:[%s1529 + $0x20] sm:$0xf]
        %v1915 = vld [vmem:[%s1529 + $0x24] sm:$0x1]
        %v1916 = vld [vmem:[%s1529 + $0x28] sm:$0xf]
        %v1917 = vld [vmem:[%s1529 + $0x2c] sm:$0x1]
        %v1918 = vld [vmem:[%s1529 + $0x30] sm:$0xf]
        %v1919 = vld [vmem:[%s1529 + $0x34] sm:$0x1]
        %v1920 = vld [vmem:[%s1529 + $0x38] sm:$0xf]
        %v1921 = vld [vmem:[%s1529 + $0x3c] sm:$0x1]
        %v1923 = vshrl.u32 %v1906, 16
        %v1925 = vrot.slane %v1923, 4
        %v1926 = vshll.u32 %v1906, 16
        %v1928 = vrot.slane %v1926, 5
        %v1929 = vor.u32 %v1925, %v1928
        %v1930 = vrot.slane %v1929, 4
        %v1932 = vshll.u32 %v1907, 16
        %v1934 = vrot.slane %v1932, 5
        %v1935 = vsel %vm565, %v1930, %v1934
        %v1937 = vshrl.u32 %v1908, 16
        %v1939 = vrot.slane %v1937, 4
        %v1940 = vshll.u32 %v1908, 16
        %v1942 = vrot.slane %v1940, 5
        %v1943 = vor.u32 %v1939, %v1942
        %v1944 = vrot.slane %v1943, 4
        %v1946 = vshll.u32 %v1909, 16
        %v1948 = vrot.slane %v1946, 5
        %v1949 = vsel %vm565, %v1944, %v1948
        %v1951 = vshrl.u32 %v1910, 16
        %v1953 = vrot.slane %v1951, 4
        %v1954 = vshll.u32 %v1910, 16
        %v1956 = vrot.slane %v1954, 5
        %v1957 = vor.u32 %v1953, %v1956
        %v1958 = vrot.slane %v1957, 4
        %v1960 = vshll.u32 %v1911, 16
        %v1962 = vrot.slane %v1960, 5
        %v1963 = vsel %vm565, %v1958, %v1962
        %v1965 = vshrl.u32 %v1912, 16
        %v1967 = vrot.slane %v1965, 4
        %v1968 = vshll.u32 %v1912, 16
        %v1970 = vrot.slane %v1968, 5
        %v1971 = vor.u32 %v1967, %v1970
        %v1972 = vrot.slane %v1971, 4
        %v1974 = vshll.u32 %v1913, 16
        %v1976 = vrot.slane %v1974, 5
        %v1977 = vsel %vm565, %v1972, %v1976
        %v1979 = vshrl.u32 %v1914, 16
        %v1981 = vrot.slane %v1979, 4
        %v1982 = vshll.u32 %v1914, 16
        %v1984 = vrot.slane %v1982, 5
        %v1985 = vor.u32 %v1981, %v1984
        %v1986 = vrot.slane %v1985, 4
        %v1988 = vshll.u32 %v1915, 16
        %v1990 = vrot.slane %v1988, 5
        %v1991 = vsel %vm565, %v1986, %v1990
        %v1993 = vshrl.u32 %v1916, 16
        %v1995 = vrot.slane %v1993, 4
        %v1996 = vshll.u32 %v1916, 16
        %v1998 = vrot.slane %v1996, 5
        %v1999 = vor.u32 %v1995, %v1998
        %v2000 = vrot.slane %v1999, 4
        %v2002 = vshll.u32 %v1917, 16
        %v2004 = vrot.slane %v2002, 5
        %v2005 = vsel %vm565, %v2000, %v2004
        %v2007 = vshrl.u32 %v1918, 16
        %v2009 = vrot.slane %v2007, 4
        %v2010 = vshll.u32 %v1918, 16
        %v2012 = vrot.slane %v2010, 5
        %v2013 = vor.u32 %v2009, %v2012
        %v2014 = vrot.slane %v2013, 4
        %v2016 = vshll.u32 %v1919, 16
        %v2018 = vrot.slane %v2016, 5
        %v2019 = vsel %vm565, %v2014, %v2018
        %v2021 = vshrl.u32 %v1920, 16
        %v2023 = vrot.slane %v2021, 4
        %v2024 = vshll.u32 %v1920, 16
        %v2026 = vrot.slane %v2024, 5
        %v2027 = vor.u32 %v2023, %v2026
        %v2028 = vrot.slane %v2027, 4
        %v2030 = vshll.u32 %v1921, 16
        %v2032 = vrot.slane %v2030, 5
        %v2033 = vsel %vm565, %v2028, %v2032
        %s2034 = scalar_lea.vmem %s181, 512
        %v2035 = vld [vmem:[%s2034] sm:$0xf]
        %v2036 = vld [vmem:[%s2034 + $0x4] sm:$0xf]
        %v2037 = vld [vmem:[%s2034 + $0x8] sm:$0xf]
        %v2038 = vld [vmem:[%s2034 + $0xc] sm:$0xf]
        %v2039 = vld [vmem:[%s2034 + $0x10] sm:$0xf]
        %v2040 = vld [vmem:[%s2034 + $0x14] sm:$0xf]
        %v2041 = vld [vmem:[%s2034 + $0x18] sm:$0xf]
        %v2042 = vld [vmem:[%s2034 + $0x1c] sm:$0xf]
        %v2043 = vld [vmem:[%s2034 + $0x20] sm:$0xf]
        %v2044 = vld [vmem:[%s2034 + $0x24] sm:$0xf]
        %v2045 = vld [vmem:[%s2034 + $0x28] sm:$0xf]
        %v2046 = vld [vmem:[%s2034 + $0x2c] sm:$0xf]
        %v2047 = vld [vmem:[%s2034 + $0x30] sm:$0xf]
        %v2048 = vld [vmem:[%s2034 + $0x34] sm:$0xf]
        %v2049 = vld [vmem:[%s2034 + $0x38] sm:$0xf]
        %v2050 = vld [vmem:[%s2034 + $0x3c] sm:$0xf]
        %v2051 = vunpack.c.l.b16 %v1935
        %v2052 = vunpack.c.l.b16 %v1949
        %v2053 = vunpack.c.l.b16 %v1963
        %v2054 = vunpack.c.l.b16 %v1977
        %v2055 = vunpack.c.l.b16 %v1991
        %v2056 = vunpack.c.l.b16 %v2005
        %v2057 = vunpack.c.l.b16 %v2019
        %v2058 = vunpack.c.l.b16 %v2033
        %v2059 = vpack.c.b16 %v2052, %v2051
        %v2060 = vpack.c.b16 %v2054, %v2053
        %v2061 = vpack.c.b16 %v2056, %v2055
        %v2062 = vpack.c.b16 %v2058, %v2057
        %v2083 = vunpack.c.l.b16 %v2035
        %v2084 = vunpack.c.l.b16 %v2036
        %v2085 = vunpack.c.l.b16 %v2037
        %v2086 = vunpack.c.l.b16 %v2038
        %v2087 = vunpack.c.l.b16 %v2039
        %v2088 = vunpack.c.l.b16 %v2040
        %v2089 = vunpack.c.l.b16 %v2041
        %v2090 = vunpack.c.l.b16 %v2042
        %v2091 = vunpack.c.l.b16 %v2043
        %v2092 = vunpack.c.l.b16 %v2044
        %v2093 = vunpack.c.l.b16 %v2045
        %v2094 = vunpack.c.l.b16 %v2046
        %v2095 = vunpack.c.l.b16 %v2047
        %v2096 = vunpack.c.l.b16 %v2048
        %v2097 = vunpack.c.l.b16 %v2049
        %v2098 = vunpack.c.l.b16 %v2050
        %v2099 = vpack.c.b16 %v2084, %v2083
        %v2100 = vpack.c.b16 %v2086, %v2085
        %v2101 = vpack.c.b16 %v2088, %v2087
        %v2102 = vpack.c.b16 %v2090, %v2089
        %v2103 = vpack.c.b16 %v2092, %v2091
        %v2104 = vpack.c.b16 %v2094, %v2093
        %v2105 = vpack.c.b16 %v2096, %v2095
        %v2106 = vpack.c.b16 %v2098, %v2097
        %2115 = vmatprep.subr.bf16.mxu0 0
        %2116 = vmatpush1.bf16.msra.mxu0 %v2106
        %2117 = vmatprep.subr.bf16.mxu0 0
        %2118 = vmatpush1.bf16.msra.mxu0 %v2105
        %2119 = vmatprep.subr.bf16.mxu0 0
        %2120 = vmatpush1.bf16.msra.mxu0 %v2104
        %2121 = vmatprep.subr.bf16.mxu0 0
        %2122 = vmatpush1.bf16.msra.mxu0 %v2103
        %2123 = vmatprep.subr.bf16.mxu0 0
        %2124 = vmatpush1.bf16.msra.mxu0 %v2102
        %2125 = vmatprep.subr.bf16.mxu0 0
        %2126 = vmatpush1.bf16.msra.mxu0 %v2101
        %2127 = vmatprep.subr.bf16.mxu0 0
        %2128 = vmatpush1.bf16.msra.mxu0 %v2100
        %2129 = vmatprep.subr.bf16.mxu0 0
        %2130 = vmatpush1.bf16.msra.mxu0 %v2099
        %2131 = vmatprep.subr.bf16.mxu0 0
        %2132 = vmatpush2.bf16.msra.mxu0 0
        %2133 = vmatprep.subr.bf16.mxu0 0
        %2134 = vmatpush2.bf16.msra.mxu0 0
        %2135 = vmatprep.subr.bf16.mxu0 0
        %2136 = vmatpush2.bf16.msra.mxu0 0
        %2137 = vmatprep.subr.bf16.mxu0 0
        %2138 = vmatpush2.bf16.msra.mxu0 0
        %2139 = vmatprep.subr.bf16.mxu0 0
        %2140 = vmatpush2.bf16.msra.mxu0 0
        %2141 = vmatprep.subr.bf16.mxu0 0
        %2142 = vmatpush2.bf16.msra.mxu0 0
        %2143 = vmatprep.subr.bf16.mxu0 0
        %2144 = vmatpush2.bf16.msra.mxu0 0
        %2145 = vmatprep.subr.bf16.mxu0 0
        %2146 = vmatpush2.bf16.msra.mxu0 0
        %2147 = vmatprep.mubr.bf16.mxu0 0
        %2148 = vmatmul.mubr.bf16.gmra.mxu0 %v2059
        %v2149 = vpop.f32.mrf.mxu0
        %v2150 = vadd.f32 0.0, %v2149
        %v2151 = vpop.f32.mrf.mxu0
        %v2152 = vpop.f32.mrf.mxu0
        %v2153 = vadd.f32 0.0, %v2152
        %v2154 = vpop.f32.mrf.mxu0
        %2155 = vmatprep.mubr.bf16.mxu0 0
        %2156 = vmatmul.mubr.bf16.gmra.mxu0 %v2060
        %v2157 = vpop.f32.mrf.mxu0
        %v2158 = vadd.f32 0.0, %v2157
        %v2159 = vpop.f32.mrf.mxu0
        %v2160 = vpop.f32.mrf.mxu0
        %v2161 = vadd.f32 0.0, %v2160
        %v2162 = vpop.f32.mrf.mxu0
        %2163 = vmatprep.mubr.bf16.mxu0 0
        %2164 = vmatmul.mubr.bf16.gmra.mxu0 %v2061
        %v2165 = vpop.f32.mrf.mxu0
        %v2166 = vadd.f32 0.0, %v2165
        %v2167 = vpop.f32.mrf.mxu0
        %v2168 = vpop.f32.mrf.mxu0
        %v2169 = vadd.f32 0.0, %v2168
        %v2170 = vpop.f32.mrf.mxu0
        %2171 = vmatprep.mubr.bf16.mxu0 0
        %2172 = vmatmul.mubr.bf16.gmra.mxu0 %v2062
        %v2173 = vpop.f32.mrf.mxu0
        %v2174 = vadd.f32 0.0, %v2173
        %v2175 = vpop.f32.mrf.mxu0
        %v2176 = vpop.f32.mrf.mxu0
        %v2177 = vadd.f32 0.0, %v2176
        %v2178 = vpop.f32.mrf.mxu0
        %2179 = vdwg.mxu0
        %v2180 = vld [vmem:[#allocation2] sm:$0xff]
        %v2181 = vld [vmem:[#allocation2 + $0x8] sm:$0xff]
        %v2182 = vld [vmem:[#allocation2 + $0x10] sm:$0xff]
        %v2183 = vld [vmem:[#allocation2 + $0x18] sm:$0xff]
        %v2184 = vld [vmem:[#allocation2 + $0x20] sm:$0xff]
        %v2185 = vld [vmem:[#allocation2 + $0x28] sm:$0xff]
        %v2186 = vld [vmem:[#allocation2 + $0x30] sm:$0xff]
        %v2187 = vld [vmem:[#allocation2 + $0x38] sm:$0xff]
        %v2188 = vadd.f32 %v2180, %v2150
        %v2189 = vadd.f32 %v2181, %v2153
        %v2190 = vadd.f32 %v2182, %v2158
        %v2191 = vadd.f32 %v2183, %v2161
        %v2192 = vadd.f32 %v2184, %v2166
        %v2193 = vadd.f32 %v2185, %v2169
        %v2194 = vadd.f32 %v2186, %v2174
        %v2195 = vadd.f32 %v2187, %v2177
        %2196 = vst [vmem:[#allocation2] sm:$0xff] %v2188
        %2197 = vst [vmem:[#allocation2 + $0x8] sm:$0xff] %v2189
        %2198 = vst [vmem:[#allocation2 + $0x10] sm:$0xff] %v2190
        %2199 = vst [vmem:[#allocation2 + $0x18] sm:$0xff] %v2191
        %2200 = vst [vmem:[#allocation2 + $0x20] sm:$0xff] %v2192
        %2201 = vst [vmem:[#allocation2 + $0x28] sm:$0xff] %v2193
        %2202 = vst [vmem:[#allocation2 + $0x30] sm:$0xff] %v2194
        %2203 = vst [vmem:[#allocation2 + $0x38] sm:$0xff] %v2195
        %v2204 = vld [vmem:[#allocation2] sm:$0xff]
        %v2205 = vld [vmem:[#allocation2 + $0x8] sm:$0xff]
        %v2206 = vld [vmem:[#allocation2 + $0x10] sm:$0xff]
        %v2207 = vld [vmem:[#allocation2 + $0x18] sm:$0xff]
        %v2208 = vld [vmem:[#allocation2 + $0x20] sm:$0xff]
        %v2209 = vld [vmem:[#allocation2 + $0x28] sm:$0xff]
        %v2210 = vld [vmem:[#allocation2 + $0x30] sm:$0xff]
        %v2211 = vld [vmem:[#allocation2 + $0x38] sm:$0xff]
        %v2212 = vpack.c.bf16 %v2205, %v2204
        %v2213 = vpack.c.bf16 %v2207, %v2206
        %v2214 = vpack.c.bf16 %v2209, %v2208
        %v2215 = vpack.c.bf16 %v2211, %v2210
        %v2220 = vunpack.c.l.b16 %v2212
        %v2221 = vunpack.c.h.b16 %v2212
        %v2222 = vunpack.c.l.b16 %v2213
        %v2223 = vunpack.c.h.b16 %v2213
        %v2224 = vunpack.c.l.b16 %v2214
        %v2225 = vunpack.c.h.b16 %v2214
        %v2226 = vunpack.c.l.b16 %v2215
        %v2227 = vunpack.c.h.b16 %v2215
        %v2228 = vpack.c.b16 %v2220, %v2220
        %v2229 = vpack.c.b16 %v2221, %v2221
        %v2230 = vpack.c.b16 %v2222, %v2222
        %v2231 = vpack.c.b16 %v2223, %v2223
        %v2232 = vpack.c.b16 %v2224, %v2224
        %v2233 = vpack.c.b16 %v2225, %v2225
        %v2234 = vpack.c.b16 %v2226, %v2226
        %v2235 = vpack.c.b16 %v2227, %v2227
        %2244 = vst [vmem:[%s172] sm:$0xf] %v2228
        %2245 = vst [vmem:[%s172 + $0x4] sm:$0xf] %v2229
        %2246 = vst [vmem:[%s172 + $0x8] sm:$0xf] %v2230
        %2247 = vst [vmem:[%s172 + $0xc] sm:$0xf] %v2231
        %2248 = vst [vmem:[%s172 + $0x10] sm:$0xf] %v2232
        %2249 = vst [vmem:[%s172 + $0x14] sm:$0xf] %v2233
        %2250 = vst [vmem:[%s172 + $0x18] sm:$0xf] %v2234
        %2251 = vst [vmem:[%s172 + $0x1c] sm:$0xf] %v2235
        %s2252 = sand.u32 %s99, 1
        %s2253 = scalar_lea.sflag [#allocation4], %s2252
        %s2254 = sand.u32 %s99, 1
        %s2255 = smul.addr %s2254, 32
        %s2256 = scalar_lea.vmem [#allocation3], %s2255
        // Predicated region
        $region29: #{tpu_custom_call.1} parent=27 // pred_check
          %p2257 = pneg %p109
        $region30: #{tpu_custom_call.1} parent=27 // pred_check_branch
          %2259 = sbr.rel (%p2257) target = $region32
        $region31: #{tpu_custom_call.1} parent=27 // pred_region
          %s2260 = smul.u32 8, %s22
          %s2262 = ssub.s32 512, 512
          %2263 = vsyncadd %s2253, %s2262
          %s2264 = sadd.s32 %s23, %s2260
          %s2265 = smul.addr %s21, 8
          %s2266 = sadd.s32 %s2264, %s2265
          %s2267 = smul.addr %s2266, 64
          %s2268 = scalar_lea.hbm %s2, %s2267
          %s2269 = sshll.u32 %s2256, 4
          %s2270 = int_to_ptr.vmem [resolvable:$true] %s2269
          %2275 = dma.vmem_to_hbm [thread:$0]  %s2270, 512, %s2268, %s2253, 64, 64, 4
        $region32: #{tpu_custom_call.1} parent=27 // pred_fallthru
          _
      $region28: #{tpu_custom_call.1} parent=5 // pred_fallthru
        _
      %p2276 = scmp.le.s32.totalorder 2, %s11
      // Predicated region
      $region33: #{tpu_custom_call.1} parent=5 // pred_check
        %p2277 = pneg %p2276
      $region34: #{tpu_custom_call.1} parent=5 // pred_check_branch
        %2279 = sbr.rel (%p2277) target = $region36
      $region35: #{tpu_custom_call.1} parent=5 // pred_region
        %s2280 = ssub.s32 %s11, 2
        // Predicated region
        $region37: #{tpu_custom_call.1} parent=35 // pred_check
          %p2281 = pneg %p115
        $region38: #{tpu_custom_call.1} parent=35 // pred_check_branch
          %2283 = sbr.rel (%p2281) target = $region40
        $region39: #{tpu_custom_call.1} parent=35 // pred_region
          %s2284 = sand.u32 %s100, 1
          %s2285 = scalar_lea.sflag [#allocation4], %s2284
          %s2286 = sand.u32 %s100, 1
          %s2287 = smul.addr %s2286, 32
          %s2288 = scalar_lea.vmem [#allocation3], %s2287
          %2289 = dma.done %s2285, 512
        $region40: #{tpu_custom_call.1} parent=35 // pred_fallthru
          _
      $region36: #{tpu_custom_call.1} parent=5 // pred_fallthru
        _
    $region6: #{tpu_custom_call.1} parent=1 // loop_footer
      %s15 = sadd.s32 1, %s11
    $region7: #{tpu_custom_call.1} parent=1 // loop_footer_branch
      %10 = sbr.rel target = $region3
    $region8: #{tpu_custom_call.1} parent=1 // loop_exit
      _
    %2290 = vsyncpa [#allocation4], 1
    %s2291 = scalar_lea.sflag [#allocation4], 1
    %2292 = vsyncpa %s2291, 1

</llo_original>
